<compile_context>
chip_gen: v5e
topology: v5e:2x2
jax: 0.10.0
libtpu: 0.0.40
codegen_flags: <defaults>
</compile_context>

<pallas_src>
import functools

import jax
import jax.numpy as jnp
from jax.experimental import pallas as pl
from jax.experimental.pallas import tpu as pltpu

LANE = 128


# ----------------------------- Pallas kernels ------------------------------

def _make_conv_stats_kernel(KH, KW, OH, OW, Cin, CoutP, stride, dilation,
                            compute_dtype):
    """Per-image direct conv (as KH*KW accumulating matmuls) + BN partials."""
    OHW = OH * OW

    def kernel(x_ref, w_ref, out_ref, stats_ref):
        # x_ref:    (1, H_pad, W_pad, Cin)   spatially padded NHWC image
        # w_ref:    (KH*KW, Cin, CoutP)      lane-padded conv weights
        # out_ref:  (1, OHW, CoutP)          conv result for this image
        # stats_ref:(1, 2, CoutP)            row 0 = sum, row 1 = sum of squares
        acc = jnp.zeros((OHW, CoutP), jnp.float32)
        for ki in range(KH):
            for kj in range(KW):
                hs = ki * dilation
                ws = kj * dilation
                if stride == 1:
                    xs = x_ref[0, hs:hs + OH, ws:ws + OW, :]        # (OH,OW,Cin)
                else:
                    xs = x_ref[0,
                               hs:hs + (OH - 1) * stride + 1,
                               ws:ws + (OW - 1) * stride + 1, :]
                    xs = xs[::stride, ::stride, :]
                # (OH*OW, Cin) -- OW is the sublane dim, layout-friendly merge.
                xs2 = xs.reshape(OHW, Cin).astype(compute_dtype)
                w = w_ref[ki * KW + kj].astype(compute_dtype)        # (Cin,CoutP)
                acc = acc + jnp.dot(xs2, w,
                                    preferred_element_type=jnp.float32)
        out_ref[0] = acc
        # Fused BN batch-stat partials for this image (no extra HBM pass).
        stats_ref[0, 0:1, :] = jnp.sum(acc, axis=0, keepdims=True)
        stats_ref[0, 1:2, :] = jnp.sum(acc * acc, axis=0, keepdims=True)

    return kernel


def _bn_relu_kernel(x_ref, scale_ref, shift_ref, o_ref):
    # x_ref/o_ref: (1, OHW, CoutP); scale/shift: (1, CoutP) -> lane broadcast.
    o_ref[...] = jnp.maximum(x_ref[...] * scale_ref[...] + shift_ref[...], 0.0)


# ------------------------------ host wrapper -------------------------------

def conv_bn_relu(x_nchw, weight, gamma, beta, *, stride=1, padding=0,
                 dilation=1, eps=1e-5, compute_dtype=jnp.float32):
    N, Cin, H, W = x_nchw.shape
    Cout, Cin_w, KH, KW = weight.shape
    assert Cin == Cin_w, "groups != 1 not supported"  # TODO(synk): grouped conv

    OH = (H + 2 * padding - dilation * (KH - 1) - 1) // stride + 1
    OW = (W + 2 * padding - dilation * (KW - 1) - 1) // stride + 1
    OHW = OH * OW
    CoutP = ((Cout + LANE - 1) // LANE) * LANE  # lane-pad channels to 128

    # NCHW -> NHWC + spatial zero padding (cheap XLA glue, single input copy).
    x = jnp.transpose(x_nchw, (0, 2, 3, 1)).astype(jnp.float32)
    xp = jnp.pad(x, ((0, 0), (padding, padding), (padding, padding), (0, 0)))
    H_pad, W_pad = xp.shape[1], xp.shape[2]

    # weight (Cout, Cin, KH, KW) -> (KH*KW, Cin, CoutP), lane padded with zeros.
    w = jnp.transpose(weight, (2, 3, 1, 0)).reshape(KH * KW, Cin, Cout)
    w = jnp.pad(w.astype(jnp.float32), ((0, 0), (0, 0), (0, CoutP - Cout)))

    conv_kernel = _make_conv_stats_kernel(KH, KW, OH, OW, Cin, CoutP,
                                          stride, dilation, compute_dtype)

    # (1) conv + fused BN partial statistics; grid over images, fully parallel.
    # TODO(synk): for very large OH*OW tiles, additionally tile over OH so the
    # per-step block fits v7x's smaller VMEM.
    conv_out, stats = pl.pallas_call(
        conv_kernel,
        out_shape=(jax.ShapeDtypeStruct((N, OHW, CoutP), jnp.float32),
                   jax.ShapeDtypeStruct((N, 2, CoutP), jnp.float32)),
        grid=(N,),
        in_specs=[
            pl.BlockSpec((1, H_pad, W_pad, Cin), lambda i: (i, 0, 0, 0)),
            pl.BlockSpec((KH * KW, Cin, CoutP), lambda i: (0, 0, 0)),
        ],
        out_specs=(
            pl.BlockSpec((1, OHW, CoutP), lambda i: (i, 0, 0)),
            pl.BlockSpec((1, 2, CoutP), lambda i: (i, 0, 0)),
        ),
        compiler_params=pltpu.CompilerParams(
            dimension_semantics=("parallel",)),
    )(xp, w)

    # Tiny final reduction of the per-image partials (plain JAX, negligible).
    M = N * OHW
    sums = jnp.sum(stats[:, 0, :], axis=0)
    sqs = jnp.sum(stats[:, 1, :], axis=0)
    mean = sums / M
    # Guard f32 cancellation in E[x^2] - mean^2 (can go slightly negative).
    var = jnp.maximum(sqs / M - mean * mean, 0.0)
    inv_std = jax.lax.rsqrt(var + eps)
    gamma_p = jnp.pad(gamma.astype(jnp.float32), (0, CoutP - Cout))
    beta_p = jnp.pad(beta.astype(jnp.float32), (0, CoutP - Cout))
    scale = (gamma_p * inv_std).reshape(1, CoutP)
    shift = (beta_p - mean * gamma_p * inv_std).reshape(1, CoutP)

    # (2) fused BN scale/shift + ReLU, in-place over conv_out (aliased).
    y = pl.pallas_call(
        _bn_relu_kernel,
        out_shape=jax.ShapeDtypeStruct((N, OHW, CoutP), jnp.float32),
        grid=(N,),
        in_specs=[
            pl.BlockSpec((1, OHW, CoutP), lambda i: (i, 0, 0)),
            pl.BlockSpec((1, CoutP), lambda i: (0, 0)),
            pl.BlockSpec((1, CoutP), lambda i: (0, 0)),
        ],
        out_specs=pl.BlockSpec((1, OHW, CoutP), lambda i: (i, 0, 0)),
        input_output_aliases={0: 0},
        compiler_params=pltpu.CompilerParams(
            dimension_semantics=("parallel",)),
    )(conv_out, scale, shift)

    # Strip channel padding and return NCHW (module contract requires NCHW).
    y = y[:, :, :Cout].reshape(N, OH, OW, Cout)
    return jnp.transpose(y, (0, 3, 1, 2))


# ------------------------------ reference ----------------------------------

def _reference(x, w, gamma, beta, stride, padding, dilation, eps):
    y = jax.lax.conv_general_dilated(
        x.astype(jnp.float32), w.astype(jnp.float32),
        window_strides=(stride, stride),
        padding=[(padding, padding), (padding, padding)],
        rhs_dilation=(dilation, dilation),
        dimension_numbers=("NCHW", "OIHW", "NCHW"))
    mean = jnp.mean(y, axis=(0, 2, 3), keepdims=True)
    var = jnp.mean((y - mean) ** 2, axis=(0, 2, 3), keepdims=True)
    yn = (y - mean) / jnp.sqrt(var + eps)
    yn = yn * gamma.reshape(1, -1, 1, 1) + beta.reshape(1, -1, 1, 1)
    return jnp.maximum(yn, 0.0)


# --------------------------------- main -------------------------------------

if __name__ == "__main__":
    # ConvBnRelu(in_channel=4, out_channel=8, kernel_size=3, stride=1, padding=1)
    N, Cin, H, W = 2, 4, 16, 16
    Cout, KH, KW = 8, 3, 3
    stride, padding, dilation = 1, 1, 1
    eps = 1e-5

    key = jax.random.PRNGKey(0)
    kx, kw, kg, kb = jax.random.split(key, 4)

    x = jax.random.normal(kx, (N, Cin, H, W), dtype=jnp.float32)
    weight = jax.random.normal(kw, (Cout, Cin, KH, KW), dtype=jnp.float32) * 0.1
    gamma = 1.0 + 0.1 * jax.random.normal(kg, (Cout,), dtype=jnp.float32)
    beta = 0.1 * jax.random.normal(kb, (Cout,), dtype=jnp.float32)

    # f32 matmul operands for the validation run (bf16 is available via
    # compute_dtype=jnp.bfloat16 on v6e/v7x but would exceed the 1e-4 check).
    fn = jax.jit(functools.partial(
        conv_bn_relu, stride=stride, padding=padding, dilation=dilation,
        eps=eps, compute_dtype=jnp.float32))

    out = jax.block_until_ready(fn(x, weight, gamma, beta))

    ref = _reference(x, weight, gamma, beta, stride, padding, dilation, eps)
    assert out.shape == ref.shape == (N, Cout, H, W)
    assert jnp.allclose(out, ref, atol=1e-4, rtol=1e-4), "mismatch vs reference"

    print("KERNEL_OK")
</pallas_src>

<mosaic_0001>
module attributes {stable_mosaic.version = 11 : i64} {
  func.func @kernel(%arg0: i32, %arg1: memref<1x18x18x4xf32, #tpu.memory_space<vmem>>, %arg2: memref<9x4x128xf32, #tpu.memory_space<vmem>>, %arg3: memref<1x256x128xf32, #tpu.memory_space<vmem>>, %arg4: memref<1x2x128xf32, #tpu.memory_space<vmem>>) attributes {dimension_semantics = [#tpu.dimension_semantics<parallel>], iteration_bounds = array<i64: 2>, scalar_prefetch = 0 : i64, scratch_operands = 0 : i64, tpu.core_type = #tpu.core_type<tc>, window_params = [{transform_indices = @transform_0, window_bounds = array<i64: 1, 18, 18, 4>}, {pipeline_mode = #tpu.pipeline_mode<synchronous>, transform_indices = @transform_1, window_bounds = array<i64: 9, 4, 128>}, {transform_indices = @transform_2, window_bounds = array<i64: 1, 256, 128>}, {transform_indices = @transform_3, window_bounds = array<i64: 1, 2, 128>}]} {
    %cst = arith.constant 0.000000e+00 : f32
    %0 = vector.broadcast %cst : f32 to vector<256x128xf32>
    %c0 = arith.constant 0 : index
    %c0_0 = arith.constant 0 : index
    %c0_1 = arith.constant 0 : index
    %c0_2 = arith.constant 0 : index
    %1 = vector.load %arg1[%c0, %c0_0, %c0_1, %c0_2] : memref<1x18x18x4xf32, #tpu.memory_space<vmem>>, vector<1x16x16x4xf32>
    %2 = vector.shape_cast %1 : vector<1x16x16x4xf32> to vector<16x16x4xf32>
    %3 = vector.shape_cast %2 : vector<16x16x4xf32> to vector<256x4xf32>
    %c0_3 = arith.constant 0 : index
    %c0_4 = arith.constant 0 : index
    %c0_5 = arith.constant 0 : index
    %4 = vector.load %arg2[%c0_3, %c0_4, %c0_5] : memref<9x4x128xf32, #tpu.memory_space<vmem>>, vector<1x4x128xf32>
    %5 = vector.shape_cast %4 : vector<1x4x128xf32> to vector<4x128xf32>
    %cst_6 = arith.constant dense<0.000000e+00> : vector<256x128xf32>
    %6 = tpu.matmul %3, %5, %cst_6 {dimension_numbers = #tpu.dot_dimension_numbers<[1], [0], [0], [1], [0, 0, 1, 1], [], []>} : vector<256x4xf32>, vector<4x128xf32>, vector<256x128xf32> -> vector<256x128xf32>
    %7 = arith.addf %0, %6 : vector<256x128xf32>
    %c0_7 = arith.constant 0 : index
    %c0_8 = arith.constant 0 : index
    %c1 = arith.constant 1 : index
    %c0_9 = arith.constant 0 : index
    %8 = vector.load %arg1[%c0_7, %c0_8, %c1, %c0_9] : memref<1x18x18x4xf32, #tpu.memory_space<vmem>>, vector<1x16x16x4xf32>
    %9 = vector.shape_cast %8 : vector<1x16x16x4xf32> to vector<16x16x4xf32>
    %10 = vector.shape_cast %9 : vector<16x16x4xf32> to vector<256x4xf32>
    %c1_10 = arith.constant 1 : index
    %c0_11 = arith.constant 0 : index
    %c0_12 = arith.constant 0 : index
    %11 = vector.load %arg2[%c1_10, %c0_11, %c0_12] : memref<9x4x128xf32, #tpu.memory_space<vmem>>, vector<1x4x128xf32>
    %12 = vector.shape_cast %11 : vector<1x4x128xf32> to vector<4x128xf32>
    %cst_13 = arith.constant dense<0.000000e+00> : vector<256x128xf32>
    %13 = tpu.matmul %10, %12, %cst_13 {dimension_numbers = #tpu.dot_dimension_numbers<[1], [0], [0], [1], [0, 0, 1, 1], [], []>} : vector<256x4xf32>, vector<4x128xf32>, vector<256x128xf32> -> vector<256x128xf32>
    %14 = arith.addf %7, %13 : vector<256x128xf32>
    %c0_14 = arith.constant 0 : index
    %c0_15 = arith.constant 0 : index
    %c2 = arith.constant 2 : index
    %c0_16 = arith.constant 0 : index
    %15 = vector.load %arg1[%c0_14, %c0_15, %c2, %c0_16] : memref<1x18x18x4xf32, #tpu.memory_space<vmem>>, vector<1x16x16x4xf32>
    %16 = vector.shape_cast %15 : vector<1x16x16x4xf32> to vector<16x16x4xf32>
    %17 = vector.shape_cast %16 : vector<16x16x4xf32> to vector<256x4xf32>
    %c2_17 = arith.constant 2 : index
    %c0_18 = arith.constant 0 : index
    %c0_19 = arith.constant 0 : index
    %18 = vector.load %arg2[%c2_17, %c0_18, %c0_19] : memref<9x4x128xf32, #tpu.memory_space<vmem>>, vector<1x4x128xf32>
    %19 = vector.shape_cast %18 : vector<1x4x128xf32> to vector<4x128xf32>
    %cst_20 = arith.constant dense<0.000000e+00> : vector<256x128xf32>
    %20 = tpu.matmul %17, %19, %cst_20 {dimension_numbers = #tpu.dot_dimension_numbers<[1], [0], [0], [1], [0, 0, 1, 1], [], []>} : vector<256x4xf32>, vector<4x128xf32>, vector<256x128xf32> -> vector<256x128xf32>
    %21 = arith.addf %14, %20 : vector<256x128xf32>
    %c0_21 = arith.constant 0 : index
    %c1_22 = arith.constant 1 : index
    %c0_23 = arith.constant 0 : index
    %c0_24 = arith.constant 0 : index
    %22 = vector.load %arg1[%c0_21, %c1_22, %c0_23, %c0_24] : memref<1x18x18x4xf32, #tpu.memory_space<vmem>>, vector<1x16x16x4xf32>
    %23 = vector.shape_cast %22 : vector<1x16x16x4xf32> to vector<16x16x4xf32>
    %24 = vector.shape_cast %23 : vector<16x16x4xf32> to vector<256x4xf32>
    %c3 = arith.constant 3 : index
    %c0_25 = arith.constant 0 : index
    %c0_26 = arith.constant 0 : index
    %25 = vector.load %arg2[%c3, %c0_25, %c0_26] : memref<9x4x128xf32, #tpu.memory_space<vmem>>, vector<1x4x128xf32>
    %26 = vector.shape_cast %25 : vector<1x4x128xf32> to vector<4x128xf32>
    %cst_27 = arith.constant dense<0.000000e+00> : vector<256x128xf32>
    %27 = tpu.matmul %24, %26, %cst_27 {dimension_numbers = #tpu.dot_dimension_numbers<[1], [0], [0], [1], [0, 0, 1, 1], [], []>} : vector<256x4xf32>, vector<4x128xf32>, vector<256x128xf32> -> vector<256x128xf32>
    %28 = arith.addf %21, %27 : vector<256x128xf32>
    %c0_28 = arith.constant 0 : index
    %c1_29 = arith.constant 1 : index
    %c1_30 = arith.constant 1 : index
    %c0_31 = arith.constant 0 : index
    %29 = vector.load %arg1[%c0_28, %c1_29, %c1_30, %c0_31] : memref<1x18x18x4xf32, #tpu.memory_space<vmem>>, vector<1x16x16x4xf32>
    %30 = vector.shape_cast %29 : vector<1x16x16x4xf32> to vector<16x16x4xf32>
    %31 = vector.shape_cast %30 : vector<16x16x4xf32> to vector<256x4xf32>
    %c4 = arith.constant 4 : index
    %c0_32 = arith.constant 0 : index
    %c0_33 = arith.constant 0 : index
    %32 = vector.load %arg2[%c4, %c0_32, %c0_33] : memref<9x4x128xf32, #tpu.memory_space<vmem>>, vector<1x4x128xf32>
    %33 = vector.shape_cast %32 : vector<1x4x128xf32> to vector<4x128xf32>
    %cst_34 = arith.constant dense<0.000000e+00> : vector<256x128xf32>
    %34 = tpu.matmul %31, %33, %cst_34 {dimension_numbers = #tpu.dot_dimension_numbers<[1], [0], [0], [1], [0, 0, 1, 1], [], []>} : vector<256x4xf32>, vector<4x128xf32>, vector<256x128xf32> -> vector<256x128xf32>
    %35 = arith.addf %28, %34 : vector<256x128xf32>
    %c0_35 = arith.constant 0 : index
    %c1_36 = arith.constant 1 : index
    %c2_37 = arith.constant 2 : index
    %c0_38 = arith.constant 0 : index
    %36 = vector.load %arg1[%c0_35, %c1_36, %c2_37, %c0_38] : memref<1x18x18x4xf32, #tpu.memory_space<vmem>>, vector<1x16x16x4xf32>
    %37 = vector.shape_cast %36 : vector<1x16x16x4xf32> to vector<16x16x4xf32>
    %38 = vector.shape_cast %37 : vector<16x16x4xf32> to vector<256x4xf32>
    %c5 = arith.constant 5 : index
    %c0_39 = arith.constant 0 : index
    %c0_40 = arith.constant 0 : index
    %39 = vector.load %arg2[%c5, %c0_39, %c0_40] : memref<9x4x128xf32, #tpu.memory_space<vmem>>, vector<1x4x128xf32>
    %40 = vector.shape_cast %39 : vector<1x4x128xf32> to vector<4x128xf32>
    %cst_41 = arith.constant dense<0.000000e+00> : vector<256x128xf32>
    %41 = tpu.matmul %38, %40, %cst_41 {dimension_numbers = #tpu.dot_dimension_numbers<[1], [0], [0], [1], [0, 0, 1, 1], [], []>} : vector<256x4xf32>, vector<4x128xf32>, vector<256x128xf32> -> vector<256x128xf32>
    %42 = arith.addf %35, %41 : vector<256x128xf32>
    %c0_42 = arith.constant 0 : index
    %c2_43 = arith.constant 2 : index
    %c0_44 = arith.constant 0 : index
    %c0_45 = arith.constant 0 : index
    %43 = vector.load %arg1[%c0_42, %c2_43, %c0_44, %c0_45] : memref<1x18x18x4xf32, #tpu.memory_space<vmem>>, vector<1x16x16x4xf32>
    %44 = vector.shape_cast %43 : vector<1x16x16x4xf32> to vector<16x16x4xf32>
    %45 = vector.shape_cast %44 : vector<16x16x4xf32> to vector<256x4xf32>
    %c6 = arith.constant 6 : index
    %c0_46 = arith.constant 0 : index
    %c0_47 = arith.constant 0 : index
    %46 = vector.load %arg2[%c6, %c0_46, %c0_47] : memref<9x4x128xf32, #tpu.memory_space<vmem>>, vector<1x4x128xf32>
    %47 = vector.shape_cast %46 : vector<1x4x128xf32> to vector<4x128xf32>
    %cst_48 = arith.constant dense<0.000000e+00> : vector<256x128xf32>
    %48 = tpu.matmul %45, %47, %cst_48 {dimension_numbers = #tpu.dot_dimension_numbers<[1], [0], [0], [1], [0, 0, 1, 1], [], []>} : vector<256x4xf32>, vector<4x128xf32>, vector<256x128xf32> -> vector<256x128xf32>
    %49 = arith.addf %42, %48 : vector<256x128xf32>
    %c0_49 = arith.constant 0 : index
    %c2_50 = arith.constant 2 : index
    %c1_51 = arith.constant 1 : index
    %c0_52 = arith.constant 0 : index
    %50 = vector.load %arg1[%c0_49, %c2_50, %c1_51, %c0_52] : memref<1x18x18x4xf32, #tpu.memory_space<vmem>>, vector<1x16x16x4xf32>
    %51 = vector.shape_cast %50 : vector<1x16x16x4xf32> to vector<16x16x4xf32>
    %52 = vector.shape_cast %51 : vector<16x16x4xf32> to vector<256x4xf32>
    %c7 = arith.constant 7 : index
    %c0_53 = arith.constant 0 : index
    %c0_54 = arith.constant 0 : index
    %53 = vector.load %arg2[%c7, %c0_53, %c0_54] : memref<9x4x128xf32, #tpu.memory_space<vmem>>, vector<1x4x128xf32>
    %54 = vector.shape_cast %53 : vector<1x4x128xf32> to vector<4x128xf32>
    %cst_55 = arith.constant dense<0.000000e+00> : vector<256x128xf32>
    %55 = tpu.matmul %52, %54, %cst_55 {dimension_numbers = #tpu.dot_dimension_numbers<[1], [0], [0], [1], [0, 0, 1, 1], [], []>} : vector<256x4xf32>, vector<4x128xf32>, vector<256x128xf32> -> vector<256x128xf32>
    %56 = arith.addf %49, %55 : vector<256x128xf32>
    %c0_56 = arith.constant 0 : index
    %c2_57 = arith.constant 2 : index
    %c2_58 = arith.constant 2 : index
    %c0_59 = arith.constant 0 : index
    %57 = vector.load %arg1[%c0_56, %c2_57, %c2_58, %c0_59] : memref<1x18x18x4xf32, #tpu.memory_space<vmem>>, vector<1x16x16x4xf32>
    %58 = vector.shape_cast %57 : vector<1x16x16x4xf32> to vector<16x16x4xf32>
    %59 = vector.shape_cast %58 : vector<16x16x4xf32> to vector<256x4xf32>
    %c8 = arith.constant 8 : index
    %c0_60 = arith.constant 0 : index
    %c0_61 = arith.constant 0 : index
    %60 = vector.load %arg2[%c8, %c0_60, %c0_61] : memref<9x4x128xf32, #tpu.memory_space<vmem>>, vector<1x4x128xf32>
    %61 = vector.shape_cast %60 : vector<1x4x128xf32> to vector<4x128xf32>
    %cst_62 = arith.constant dense<0.000000e+00> : vector<256x128xf32>
    %62 = tpu.matmul %59, %61, %cst_62 {dimension_numbers = #tpu.dot_dimension_numbers<[1], [0], [0], [1], [0, 0, 1, 1], [], []>} : vector<256x4xf32>, vector<4x128xf32>, vector<256x128xf32> -> vector<256x128xf32>
    %63 = arith.addf %56, %62 : vector<256x128xf32>
    %c0_63 = arith.constant 0 : index
    %c0_64 = arith.constant 0 : index
    %c0_65 = arith.constant 0 : index
    %64 = vector.load %arg3[%c0_63, %c0_64, %c0_65] : memref<1x256x128xf32, #tpu.memory_space<vmem>>, vector<1x256x128xf32>
    %65 = vector.shape_cast %64 : vector<1x256x128xf32> to vector<256x128xf32>
    %66 = vector.shape_cast %63 : vector<256x128xf32> to vector<1x256x128xf32>
    tpu.vector_store %arg3[%c0_63, %c0_64, %c0_65], %66 {strides = array<i32>} : memref<1x256x128xf32, #tpu.memory_space<vmem>>, vector<1x256x128xf32>,
    %cst_66 = arith.constant dense<0.000000e+00> : vector<128xf32>
    %67 = vector.multi_reduction <add>, %63, %cst_66 [0] : vector<256x128xf32> to vector<128xf32>
    %68 = vector.shape_cast %67 : vector<128xf32> to vector<1x128xf32>
    %c0_67 = arith.constant 0 : index
    %c0_68 = arith.constant 0 : index
    %c0_69 = arith.constant 0 : index
    %69 = vector.load %arg4[%c0_67, %c0_68, %c0_69] : memref<1x2x128xf32, #tpu.memory_space<vmem>>, vector<1x1x128xf32>
    %70 = vector.shape_cast %69 : vector<1x1x128xf32> to vector<1x128xf32>
    %71 = vector.shape_cast %68 : vector<1x128xf32> to vector<1x1x128xf32>
    tpu.vector_store %arg4[%c0_67, %c0_68, %c0_69], %71 {strides = array<i32>} : memref<1x2x128xf32, #tpu.memory_space<vmem>>, vector<1x1x128xf32>,
    %72 = arith.mulf %63, %63 : vector<256x128xf32>
    %cst_70 = arith.constant dense<0.000000e+00> : vector<128xf32>
    %73 = vector.multi_reduction <add>, %72, %cst_70 [0] : vector<256x128xf32> to vector<128xf32>
    %74 = vector.shape_cast %73 : vector<128xf32> to vector<1x128xf32>
    %c0_71 = arith.constant 0 : index
    %c1_72 = arith.constant 1 : index
    %c0_73 = arith.constant 0 : index
    %75 = vector.load %arg4[%c0_71, %c1_72, %c0_73] : memref<1x2x128xf32, #tpu.memory_space<vmem>>, vector<1x1x128xf32>
    %76 = vector.shape_cast %75 : vector<1x1x128xf32> to vector<1x128xf32>
    %77 = vector.shape_cast %74 : vector<1x128xf32> to vector<1x1x128xf32>
    tpu.vector_store %arg4[%c0_71, %c1_72, %c0_73], %77 {strides = array<i32>} : memref<1x2x128xf32, #tpu.memory_space<vmem>>, vector<1x1x128xf32>,
    return
  }
  func.func @transform_0(%arg0: i32) -> (i32, i32, i32, i32) {
    %c0_i32 = arith.constant 0 : i32
    %c0_i32_0 = arith.constant 0 : i32
    %c0_i32_1 = arith.constant 0 : i32
    %c0_i32_2 = arith.constant 0 : i32
    return %arg0, %c0_i32, %c0_i32_0, %c0_i32_1 : i32, i32, i32, i32
  }
  func.func @transform_1(%arg0: i32) -> (i32, i32, i32) {
    %c0_i32 = arith.constant 0 : i32
    %c0_i32_0 = arith.constant 0 : i32
    %c0_i32_1 = arith.constant 0 : i32
    %c0_i32_2 = arith.constant 0 : i32
    return %c0_i32, %c0_i32_0, %c0_i32_1 : i32, i32, i32
  }
  func.func @transform_2(%arg0: i32) -> (i32, i32, i32) {
    %c0_i32 = arith.constant 0 : i32
    %c0_i32_0 = arith.constant 0 : i32
    %c0_i32_1 = arith.constant 0 : i32
    return %arg0, %c0_i32, %c0_i32_0 : i32, i32, i32
  }
  func.func @transform_3(%arg0: i32) -> (i32, i32, i32) {
    %c0_i32 = arith.constant 0 : i32
    %c0_i32_0 = arith.constant 0 : i32
    %c0_i32_1 = arith.constant 0 : i32
    return %arg0, %c0_i32, %c0_i32_0 : i32, i32, i32
  }
}

module attributes {stable_mosaic.version = 11 : i64} {
  func.func @_bn_relu_kernel(%arg0: i32, %arg1: memref<1x256x128xf32, #tpu.memory_space<vmem>>, %arg2: memref<1x128xf32, #tpu.memory_space<vmem>>, %arg3: memref<1x128xf32, #tpu.memory_space<vmem>>, %arg4: memref<1x256x128xf32, #tpu.memory_space<vmem>>) attributes {dimension_semantics = [#tpu.dimension_semantics<parallel>], iteration_bounds = array<i64: 2>, scalar_prefetch = 0 : i64, scratch_operands = 0 : i64, tpu.core_type = #tpu.core_type<tc>, window_params = [{transform_indices = @transform_0, window_bounds = array<i64: 1, 256, 128>}, {pipeline_mode = #tpu.pipeline_mode<synchronous>, transform_indices = @transform_1, window_bounds = array<i64: 1, 128>}, {pipeline_mode = #tpu.pipeline_mode<synchronous>, transform_indices = @transform_2, window_bounds = array<i64: 1, 128>}, {transform_indices = @transform_3, window_bounds = array<i64: 1, 256, 128>}]} {
    %c0 = arith.constant 0 : index
    %c0_0 = arith.constant 0 : index
    %c0_1 = arith.constant 0 : index
    %0 = vector.load %arg1[%c0, %c0_0, %c0_1] : memref<1x256x128xf32, #tpu.memory_space<vmem>>, vector<1x256x128xf32>
    %c0_2 = arith.constant 0 : index
    %c0_3 = arith.constant 0 : index
    %1 = vector.load %arg2[%c0_2, %c0_3] : memref<1x128xf32, #tpu.memory_space<vmem>>, vector<1x128xf32>
    %2 = vector.shape_cast %1 : vector<1x128xf32> to vector<1x1x128xf32>
    %3 = vector.broadcast %2 : vector<1x1x128xf32> to vector<1x256x128xf32>
    %4 = arith.mulf %0, %3 : vector<1x256x128xf32>
    %c0_4 = arith.constant 0 : index
    %c0_5 = arith.constant 0 : index
    %5 = vector.load %arg3[%c0_4, %c0_5] : memref<1x128xf32, #tpu.memory_space<vmem>>, vector<1x128xf32>
    %6 = vector.shape_cast %5 : vector<1x128xf32> to vector<1x1x128xf32>
    %7 = vector.broadcast %6 : vector<1x1x128xf32> to vector<1x256x128xf32>
    %8 = arith.addf %4, %7 : vector<1x256x128xf32>
    %cst = arith.constant 0.000000e+00 : f32
    %9 = vector.broadcast %cst : f32 to vector<1x256x128xf32>
    %10 = arith.maximumf %8, %9 : vector<1x256x128xf32>
    %c0_6 = arith.constant 0 : index
    %c0_7 = arith.constant 0 : index
    %c0_8 = arith.constant 0 : index
    %11 = vector.load %arg4[%c0_6, %c0_7, %c0_8] : memref<1x256x128xf32, #tpu.memory_space<vmem>>, vector<1x256x128xf32>
    tpu.vector_store %arg4[%c0_6, %c0_7, %c0_8], %10 {strides = array<i32>} : memref<1x256x128xf32, #tpu.memory_space<vmem>>, vector<1x256x128xf32>,
    return
  }
  func.func @transform_0(%arg0: i32) -> (i32, i32, i32) {
    %c0_i32 = arith.constant 0 : i32
    %c0_i32_0 = arith.constant 0 : i32
    %c0_i32_1 = arith.constant 0 : i32
    return %arg0, %c0_i32, %c0_i32_0 : i32, i32, i32
  }
  func.func @transform_1(%arg0: i32) -> (i32, i32) {
    %c0_i32 = arith.constant 0 : i32
    %c0_i32_0 = arith.constant 0 : i32
    %c0_i32_1 = arith.constant 0 : i32
    return %c0_i32, %c0_i32_0 : i32, i32
  }
  func.func @transform_2(%arg0: i32) -> (i32, i32) {
    %c0_i32 = arith.constant 0 : i32
    %c0_i32_0 = arith.constant 0 : i32
    %c0_i32_1 = arith.constant 0 : i32
    return %c0_i32, %c0_i32_0 : i32, i32
  }
  func.func @transform_3(%arg0: i32) -> (i32, i32, i32) {
    %c0_i32 = arith.constant 0 : i32
    %c0_i32_0 = arith.constant 0 : i32
    %c0_i32_1 = arith.constant 0 : i32
    return %arg0, %c0_i32, %c0_i32_0 : i32, i32, i32
  }
}

</mosaic_0001>

<llo_original>
// kernel: conv_bn_relu.3
$region0: #{conv_bn_relu.3}
  #allocation0 [shape = 'u32[]', space=smem, size = 0x4, offset = 0x4, fixed_abs, tag = 'smem constant byte address 0x4 - core index']
  #allocation1 [shape = 'u32[72,128]{1,0:T(1,128)}', space=vmem, size = 0x9000, scoped, tag = 'internal scratch']
  %s0 = inlined_call_operand.vmem [shape: f32[2,256,128], index: 0, kind: input, shape index: {}, may-alias: {0,3}]
  %s1 = inlined_call_operand.vmem [shape: f32[1,128], index: 1, kind: input, shape index: {}]
  %s2 = inlined_call_operand.vmem [shape: f32[1,128], index: 2, kind: input, shape index: {}]
  %s3 = inlined_call_operand.vmem [shape: f32[2,256,128], index: 3, kind: output, shape index: {}, may-alias: {0,3}]
  %s4 = sld [smem:[#allocation0]]
  $region45: #{conv_bn_relu.3} parent=0
    _
  %s6 = ssub.s32 1, %s4
  %s7 = scalar_select 0, %s6, %s4
  loop: start=0, step=1, limit=4
  $region2: #{conv_bn_relu.3} parent=0 // loop_pre_header
    _
  $region3: #{conv_bn_relu.3} parent=0 // loop_header
    %s9 = sphi 0, %s13
    %p10 = scmp.ge.s32.totalorder %s9, 4
    %s19 = sphi 0, %s21
    %s22 = sphi 0, %s19
    %s23 = sphi 0, %s22
    %s39 = sphi 0, %s23
    %s43 = sphi 0, %s43
    %s45 = sphi 0, %s43
    %s46 = sphi 0, %s45
    %s60 = sphi 0, %s46
    %s64 = sphi 0, %s64
    %s66 = sphi 0, %s64
    %s67 = sphi 0, %s66
    %s81 = sphi 0, %s67
    %s87 = sphi 0, %s89
    %s90 = sphi 0, %s87
    %s91 = sphi 0, %s90
    %s107 = sphi 0, %s91
  $region4: #{conv_bn_relu.3} parent=0 // loop_header_branch
    %12 = sbr.rel (%p10) target = $region8
  $region5: #{conv_bn_relu.3} parent=0 // loop_body
    %s14 = ssub.s32 %s9, 1
    %s15 = ssub.s32 %s9, 2
    %s16 = sadd.s32 %s9, 1
    %s17 = ssub.s32 %s9, %s16
    %p18 = scmp.eq.s32.totalorder %s17, 0
    %s20 = sadd.s32 %s19, 1
    %s21 = scalar_select %p18, %s19, %s20
    %p24 = pneg %p18
    %p25 = scmp.eq.s32.totalorder %s9, 1
    %p26 = por %p24, %p25
    %p27 = scmp.ne.s32.totalorder %s19, %s22
    %p28 = scmp.eq.s32.totalorder %s9, 0
    %p29 = por %p27, %p28
    %p30 = scmp.ne.s32.totalorder %s19, %s22
    %p31 = scmp.eq.s32.totalorder %s14, 1
    %p32 = por %p30, %p31
    %p33 = scmp.ne.s32.totalorder %s22, %s23
    %p34 = scmp.eq.s32.totalorder %s14, 0
    %p35 = por %p33, %p34
    %p36 = scmp.ne.s32.totalorder %s22, %s23
    %p37 = scmp.eq.s32.totalorder %s15, 1
    %p38 = por %p36, %p37
    %p40 = scmp.ne.s32.totalorder %s23, %s39
    %p41 = scmp.eq.s32.totalorder %s15, 0
    %p42 = por %p40, %p41
    %s44 = sadd.s32 %s43, 1
    %p47 = scmp.eq.s32.totalorder %s9, 1
    %p48 = scmp.ne.s32.totalorder %s43, %s45
    %p49 = scmp.eq.s32.totalorder %s9, 0
    %p50 = por %p48, %p49
    %p51 = scmp.ne.s32.totalorder %s43, %s45
    %p52 = scmp.eq.s32.totalorder %s14, 1
    %p53 = por %p51, %p52
    %p54 = scmp.ne.s32.totalorder %s45, %s46
    %p55 = scmp.eq.s32.totalorder %s14, 0
    %p56 = por %p54, %p55
    %p57 = scmp.ne.s32.totalorder %s45, %s46
    %p58 = scmp.eq.s32.totalorder %s15, 1
    %p59 = por %p57, %p58
    %p61 = scmp.ne.s32.totalorder %s46, %s60
    %p62 = scmp.eq.s32.totalorder %s15, 0
    %p63 = por %p61, %p62
    %s65 = sadd.s32 %s64, 1
    %p68 = scmp.eq.s32.totalorder %s9, 1
    %p69 = scmp.ne.s32.totalorder %s64, %s66
    %p70 = scmp.eq.s32.totalorder %s9, 0
    %p71 = por %p69, %p70
    %p72 = scmp.ne.s32.totalorder %s64, %s66
    %p73 = scmp.eq.s32.totalorder %s14, 1
    %p74 = por %p72, %p73
    %p75 = scmp.ne.s32.totalorder %s66, %s67
    %p76 = scmp.eq.s32.totalorder %s14, 0
    %p77 = por %p75, %p76
    %p78 = scmp.ne.s32.totalorder %s66, %s67
    %p79 = scmp.eq.s32.totalorder %s15, 1
    %p80 = por %p78, %p79
    %p82 = scmp.ne.s32.totalorder %s67, %s81
    %p83 = scmp.eq.s32.totalorder %s15, 0
    %p84 = por %p82, %p83
    %s85 = ssub.s32 %s9, %s16
    %p86 = scmp.eq.s32.totalorder %s85, 0
    %s88 = sadd.s32 %s87, 1
    %s89 = scalar_select %p86, %s87, %s88
    %p92 = pneg %p86
    %p93 = scmp.eq.s32.totalorder %s9, 1
    %p94 = por %p92, %p93
    %p95 = scmp.ne.s32.totalorder %s87, %s90
    %p96 = scmp.eq.s32.totalorder %s9, 0
    %p97 = por %p95, %p96
    %p98 = scmp.ne.s32.totalorder %s87, %s90
    %p99 = scmp.eq.s32.totalorder %s14, 1
    %p100 = por %p98, %p99
    %p101 = scmp.ne.s32.totalorder %s90, %s91
    %p102 = scmp.eq.s32.totalorder %s14, 0
    %p103 = por %p101, %p102
    %p104 = scmp.ne.s32.totalorder %s90, %s91
    %p105 = scmp.eq.s32.totalorder %s15, 1
    %p106 = por %p104, %p105
    %p108 = scmp.ne.s32.totalorder %s91, %s107
    %p109 = scmp.eq.s32.totalorder %s15, 0
    %p110 = por %p108, %p109
    %p111 = scmp.le.s32.totalorder 1, %s9
    %p112 = scmp.lt.s32.totalorder %s9, 3
    %p113 = pnand %p111, %p112
    %p114 = pneg %p113
    // Predicated region
    $region9: #{conv_bn_relu.3} parent=5 // pred_check
      _
    $region10: #{conv_bn_relu.3} parent=5 // pred_check_branch
      %116 = sbr.rel (%p113) target = $region12
    $region11: #{conv_bn_relu.3} parent=5 // pred_region
      %s117 = ssub.s32 %s9, 1
      // Predicated region
      $region13: #{conv_bn_relu.3} parent=11 // pred_check
        %p118 = pneg %p56
      $region14: #{conv_bn_relu.3} parent=11 // pred_check_branch
        %120 = sbr.rel (%p118) target = $region16
      $region15: #{conv_bn_relu.3} parent=11 // pred_region
        _
      $region16: #{conv_bn_relu.3} parent=11 // pred_fallthru
        _
      // Predicated region
      $region17: #{conv_bn_relu.3} parent=11 // pred_check
        %p121 = pneg %p77
      $region18: #{conv_bn_relu.3} parent=11 // pred_check_branch
        %123 = sbr.rel (%p121) target = $region20
      $region19: #{conv_bn_relu.3} parent=11 // pred_region
        _
      $region20: #{conv_bn_relu.3} parent=11 // pred_fallthru
        _
    $region12: #{conv_bn_relu.3} parent=5 // pred_fallthru
      _
    %p124 = scmp.lt.s32.totalorder %s9, 2
    // Predicated region
    $region21: #{conv_bn_relu.3} parent=5 // pred_check
      %p125 = pneg %p124
    $region22: #{conv_bn_relu.3} parent=5 // pred_check_branch
      %127 = sbr.rel (%p125) target = $region24
    $region23: #{conv_bn_relu.3} parent=5 // pred_region
      // Predicated region
      $region25: #{conv_bn_relu.3} parent=23 // pred_check
        %p128 = pneg %p29
      $region26: #{conv_bn_relu.3} parent=23 // pred_check_branch
        %130 = sbr.rel (%p128) target = $region28
      $region27: #{conv_bn_relu.3} parent=23 // pred_region
        %p131 = scmp.lt.s32.totalorder %s9, 1
        %s132 = scalar_select %p131, %s9, 1
        %s133 = smul.addr %s132, 32
        %s134 = smul.addr %s133, 8
        %s135 = scalar_lea.vmem %s0, %s134
      $region28: #{conv_bn_relu.3} parent=23 // pred_fallthru
        _
    $region24: #{conv_bn_relu.3} parent=5 // pred_fallthru
      _
    %p136 = scmp.le.s32.totalorder 1, %s9
    %p137 = scmp.lt.s32.totalorder %s9, 3
    %p138 = pnand %p136, %p137
    %p139 = pneg %p138
    // Predicated region
    $region29: #{conv_bn_relu.3} parent=5 // pred_check
      _
    $region30: #{conv_bn_relu.3} parent=5 // pred_check_branch
      %141 = sbr.rel (%p138) target = $region32
    $region31: #{conv_bn_relu.3} parent=5 // pred_region
      %s142 = ssub.s32 %s9, 1
      %p143 = scmp.lt.s32.totalorder %s14, 1
      %s144 = scalar_select %p143, %s14, 1
      %s145 = smul.addr %s144, 32
      %s146 = smul.addr %s145, 8
      %s147 = scalar_lea.vmem %s0, %s146
      %p148 = pneg %p35
      %p149 = pneg %p32
      %p150 = pneg %p56
      %p151 = pneg %p53
      %p152 = pneg %p77
      %p153 = pneg %p74
      %p154 = pneg %p103
      %p155 = pneg %p100
      %p156 = scmp.lt.s32.totalorder %s14, 1
      %s157 = scalar_select %p156, %s14, 1
      %s158 = smul.addr %s157, 32
      %s159 = smul.addr %s158, 8
      %s160 = scalar_lea.vmem %s3, %s159
      %p161 = scmp.lt.s32.totalorder %s14, 1
      %s162 = scalar_select %p161, %s14, 1
      %s163 = smul.addr %s162, 32
      %s164 = smul.addr %s163, 8
      %s165 = scalar_lea.vmem %s0, %s164
      %p166 = scmp.lt.s32.totalorder %s14, 1
      %s167 = scalar_select %p166, %s14, 1
      %s168 = smul.addr %s167, 32
      %s169 = smul.addr %s168, 8
      %s170 = scalar_lea.vmem %s3, %s169
      %v171 = vld [vmem:[%s165] sm:$0xff]
      %v172 = vld [vmem:[%s165 + $0x8] sm:$0xff]
      %v173 = vld [vmem:[%s165 + $0x10] sm:$0xff]
      %v174 = vld [vmem:[%s165 + $0x18] sm:$0xff]
      %v175 = vld [vmem:[%s165 + $0x20] sm:$0xff]
      %v176 = vld [vmem:[%s165 + $0x28] sm:$0xff]
      %v177 = vld [vmem:[%s165 + $0x30] sm:$0xff]
      %v178 = vld [vmem:[%s165 + $0x38] sm:$0xff]
      %v179 = vld [vmem:[%s165 + $0x40] sm:$0xff]
      %v180 = vld [vmem:[%s165 + $0x48] sm:$0xff]
      %v181 = vld [vmem:[%s165 + $0x50] sm:$0xff]
      %v182 = vld [vmem:[%s165 + $0x58] sm:$0xff]
      %v183 = vld [vmem:[%s165 + $0x60] sm:$0xff]
      %v184 = vld [vmem:[%s165 + $0x68] sm:$0xff]
      %v185 = vld [vmem:[%s165 + $0x70] sm:$0xff]
      %v186 = vld [vmem:[%s165 + $0x78] sm:$0xff]
      %v187 = vld [vmem:[%s165 + $0x80] sm:$0xff]
      %v188 = vld [vmem:[%s165 + $0x88] sm:$0xff]
      %v189 = vld [vmem:[%s165 + $0x90] sm:$0xff]
      %v190 = vld [vmem:[%s165 + $0x98] sm:$0xff]
      %v191 = vld [vmem:[%s165 + $0xa0] sm:$0xff]
      %v192 = vld [vmem:[%s165 + $0xa8] sm:$0xff]
      %v193 = vld [vmem:[%s165 + $0xb0] sm:$0xff]
      %v194 = vld [vmem:[%s165 + $0xb8] sm:$0xff]
      %v195 = vld [vmem:[%s165 + $0xc0] sm:$0xff]
      %v196 = vld [vmem:[%s165 + $0xc8] sm:$0xff]
      %v197 = vld [vmem:[%s165 + $0xd0] sm:$0xff]
      %v198 = vld [vmem:[%s165 + $0xd8] sm:$0xff]
      %v199 = vld [vmem:[%s165 + $0xe0] sm:$0xff]
      %v200 = vld [vmem:[%s165 + $0xe8] sm:$0xff]
      %v201 = vld [vmem:[%s165 + $0xf0] sm:$0xff]
      %v202 = vld [vmem:[%s165 + $0xf8] sm:$0xff]
      %v203 = vld [vmem:[%s1] sm:$0x1]
      %v205 = vperm.slane %v203, 0
      %v207 = vmul.f32 %v171, %v205
      %v208 = vmul.f32 %v172, %v205
      %v209 = vmul.f32 %v173, %v205
      %v210 = vmul.f32 %v174, %v205
      %v211 = vmul.f32 %v175, %v205
      %v212 = vmul.f32 %v176, %v205
      %v213 = vmul.f32 %v177, %v205
      %v214 = vmul.f32 %v178, %v205
      %v215 = vmul.f32 %v179, %v205
      %v216 = vmul.f32 %v180, %v205
      %v217 = vmul.f32 %v181, %v205
      %v218 = vmul.f32 %v182, %v205
      %v219 = vmul.f32 %v183, %v205
      %v220 = vmul.f32 %v184, %v205
      %v221 = vmul.f32 %v185, %v205
      %v222 = vmul.f32 %v186, %v205
      %v223 = vmul.f32 %v187, %v205
      %v224 = vmul.f32 %v188, %v205
      %v225 = vmul.f32 %v189, %v205
      %v226 = vmul.f32 %v190, %v205
      %v227 = vmul.f32 %v191, %v205
      %v228 = vmul.f32 %v192, %v205
      %v229 = vmul.f32 %v193, %v205
      %v230 = vmul.f32 %v194, %v205
      %v231 = vmul.f32 %v195, %v205
      %v232 = vmul.f32 %v196, %v205
      %v233 = vmul.f32 %v197, %v205
      %v234 = vmul.f32 %v198, %v205
      %v235 = vmul.f32 %v199, %v205
      %v236 = vmul.f32 %v200, %v205
      %v237 = vmul.f32 %v201, %v205
      %v238 = vmul.f32 %v202, %v205
      %v239 = vld [vmem:[%s2] sm:$0x1]
      %v241 = vperm.slane %v239, 0
      %v243 = vadd.f32 %v207, %v241
      %v244 = vadd.f32 %v208, %v241
      %v245 = vadd.f32 %v209, %v241
      %v246 = vadd.f32 %v210, %v241
      %v247 = vadd.f32 %v211, %v241
      %v248 = vadd.f32 %v212, %v241
      %v249 = vadd.f32 %v213, %v241
      %v250 = vadd.f32 %v214, %v241
      %v251 = vadd.f32 %v215, %v241
      %v252 = vadd.f32 %v216, %v241
      %v253 = vadd.f32 %v217, %v241
      %v254 = vadd.f32 %v218, %v241
      %v255 = vadd.f32 %v219, %v241
      %v256 = vadd.f32 %v220, %v241
      %v257 = vadd.f32 %v221, %v241
      %v258 = vadd.f32 %v222, %v241
      %v259 = vadd.f32 %v223, %v241
      %v260 = vadd.f32 %v224, %v241
      %v261 = vadd.f32 %v225, %v241
      %v262 = vadd.f32 %v226, %v241
      %v263 = vadd.f32 %v227, %v241
      %v264 = vadd.f32 %v228, %v241
      %v265 = vadd.f32 %v229, %v241
      %v266 = vadd.f32 %v230, %v241
      %v267 = vadd.f32 %v231, %v241
      %v268 = vadd.f32 %v232, %v241
      %v269 = vadd.f32 %v233, %v241
      %v270 = vadd.f32 %v234, %v241
      %v271 = vadd.f32 %v235, %v241
      %v272 = vadd.f32 %v236, %v241
      %v273 = vadd.f32 %v237, %v241
      %v274 = vadd.f32 %v238, %v241
      %v275 = vmax.f32 %v243, 0.0
      %v276 = vmax.f32 %v244, 0.0
      %v277 = vmax.f32 %v245, 0.0
      %v278 = vmax.f32 %v246, 0.0
      %v279 = vmax.f32 %v247, 0.0
      %v280 = vmax.f32 %v248, 0.0
      %v281 = vmax.f32 %v249, 0.0
      %v282 = vmax.f32 %v250, 0.0
      %v283 = vmax.f32 %v251, 0.0
      %v284 = vmax.f32 %v252, 0.0
      %v285 = vmax.f32 %v253, 0.0
      %v286 = vmax.f32 %v254, 0.0
      %v287 = vmax.f32 %v255, 0.0
      %v288 = vmax.f32 %v256, 0.0
      %v289 = vmax.f32 %v257, 0.0
      %v290 = vmax.f32 %v258, 0.0
      %v291 = vmax.f32 %v259, 0.0
      %v292 = vmax.f32 %v260, 0.0
      %v293 = vmax.f32 %v261, 0.0
      %v294 = vmax.f32 %v262, 0.0
      %v295 = vmax.f32 %v263, 0.0
      %v296 = vmax.f32 %v264, 0.0
      %v297 = vmax.f32 %v265, 0.0
      %v298 = vmax.f32 %v266, 0.0
      %v299 = vmax.f32 %v267, 0.0
      %v300 = vmax.f32 %v268, 0.0
      %v301 = vmax.f32 %v269, 0.0
      %v302 = vmax.f32 %v270, 0.0
      %v303 = vmax.f32 %v271, 0.0
      %v304 = vmax.f32 %v272, 0.0
      %v305 = vmax.f32 %v273, 0.0
      %v306 = vmax.f32 %v274, 0.0
      %307 = vst [vmem:[%s170] sm:$0xff] %v275
      %308 = vst [vmem:[%s170 + $0x8] sm:$0xff] %v276
      %309 = vst [vmem:[%s170 + $0x10] sm:$0xff] %v277
      %310 = vst [vmem:[%s170 + $0x18] sm:$0xff] %v278
      %311 = vst [vmem:[%s170 + $0x20] sm:$0xff] %v279
      %312 = vst [vmem:[%s170 + $0x28] sm:$0xff] %v280
      %313 = vst [vmem:[%s170 + $0x30] sm:$0xff] %v281
      %314 = vst [vmem:[%s170 + $0x38] sm:$0xff] %v282
      %315 = vst [vmem:[%s170 + $0x40] sm:$0xff] %v283
      %316 = vst [vmem:[%s170 + $0x48] sm:$0xff] %v284
      %317 = vst [vmem:[%s170 + $0x50] sm:$0xff] %v285
      %318 = vst [vmem:[%s170 + $0x58] sm:$0xff] %v286
      %319 = vst [vmem:[%s170 + $0x60] sm:$0xff] %v287
      %320 = vst [vmem:[%s170 + $0x68] sm:$0xff] %v288
      %321 = vst [vmem:[%s170 + $0x70] sm:$0xff] %v289
      %322 = vst [vmem:[%s170 + $0x78] sm:$0xff] %v290
      %323 = vst [vmem:[%s170 + $0x80] sm:$0xff] %v291
      %324 = vst [vmem:[%s170 + $0x88] sm:$0xff] %v292
      %325 = vst [vmem:[%s170 + $0x90] sm:$0xff] %v293
      %326 = vst [vmem:[%s170 + $0x98] sm:$0xff] %v294
      %327 = vst [vmem:[%s170 + $0xa0] sm:$0xff] %v295
      %328 = vst [vmem:[%s170 + $0xa8] sm:$0xff] %v296
      %329 = vst [vmem:[%s170 + $0xb0] sm:$0xff] %v297
      %330 = vst [vmem:[%s170 + $0xb8] sm:$0xff] %v298
      %331 = vst [vmem:[%s170 + $0xc0] sm:$0xff] %v299
      %332 = vst [vmem:[%s170 + $0xc8] sm:$0xff] %v300
      %333 = vst [vmem:[%s170 + $0xd0] sm:$0xff] %v301
      %334 = vst [vmem:[%s170 + $0xd8] sm:$0xff] %v302
      %335 = vst [vmem:[%s170 + $0xe0] sm:$0xff] %v303
      %336 = vst [vmem:[%s170 + $0xe8] sm:$0xff] %v304
      %337 = vst [vmem:[%s170 + $0xf0] sm:$0xff] %v305
      %338 = vst [vmem:[%s170 + $0xf8] sm:$0xff] %v306
      %p339 = scmp.lt.s32.totalorder %s14, 1
      %s340 = scalar_select %p339, %s14, 1
      %s341 = smul.addr %s340, 32
      %s342 = smul.addr %s341, 8
      %s343 = scalar_lea.vmem %s3, %s342
      // Predicated region
      $region33: #{conv_bn_relu.3} parent=31 // pred_check
        %p344 = pneg %p100
      $region34: #{conv_bn_relu.3} parent=31 // pred_check_branch
        %346 = sbr.rel (%p344) target = $region36
      $region35: #{conv_bn_relu.3} parent=31 // pred_region
        _
      $region36: #{conv_bn_relu.3} parent=31 // pred_fallthru
        _
    $region32: #{conv_bn_relu.3} parent=5 // pred_fallthru
      _
    %p347 = scmp.le.s32.totalorder 2, %s9
    // Predicated region
    $region37: #{conv_bn_relu.3} parent=5 // pred_check
      %p348 = pneg %p347
    $region38: #{conv_bn_relu.3} parent=5 // pred_check_branch
      %350 = sbr.rel (%p348) target = $region40
    $region39: #{conv_bn_relu.3} parent=5 // pred_region
      %s351 = ssub.s32 %s9, 2
      // Predicated region
      $region41: #{conv_bn_relu.3} parent=39 // pred_check
        %p352 = pneg %p106
      $region42: #{conv_bn_relu.3} parent=39 // pred_check_branch
        %354 = sbr.rel (%p352) target = $region44
      $region43: #{conv_bn_relu.3} parent=39 // pred_region
        %p355 = scmp.lt.s32.totalorder %s15, 1
        %s356 = scalar_select %p355, %s15, 1
        %s357 = smul.addr %s356, 32
        %s358 = smul.addr %s357, 8
        %s359 = scalar_lea.vmem %s3, %s358
      $region44: #{conv_bn_relu.3} parent=39 // pred_fallthru
        _
    $region40: #{conv_bn_relu.3} parent=5 // pred_fallthru
      _
  $region6: #{conv_bn_relu.3} parent=0 // loop_footer
    %s13 = sadd.s32 1, %s9
  $region7: #{conv_bn_relu.3} parent=0 // loop_footer_branch
    %8 = sbr.rel target = $region3
  $region8: #{conv_bn_relu.3} parent=0 // loop_exit
    _

// kernel: conv_bn_relu.2
$region0: #{conv_bn_relu.2}
  #allocation0 [shape = 'u32[]', space=smem, size = 0x4, offset = 0x4, fixed_abs, tag = 'smem constant byte address 0x4 - core index']
  #allocation1 [shape = 'u32[72,128]{1,0:T(1,128)}', space=vmem, size = 0x9000, scoped, tag = 'internal scratch']
  %s0 = inlined_call_operand.vmem [shape: f32[2,18,18,4], index: 0, kind: input, shape index: {}]
  %s1 = inlined_call_operand.vmem [shape: f32[9,4,128], index: 1, kind: input, shape index: {}]
  %s2 = inlined_call_operand.vmem [shape: f32[2,256,128], index: 2, kind: output, shape index: {0}]
  %s3 = inlined_call_operand.vmem [shape: f32[2,2,128], index: 3, kind: output, shape index: {1}]
  %4 = xla_tuple %s2, %s3
  %s5 = sld [smem:[#allocation0]]
  $region49: #{conv_bn_relu.2} parent=0
    _
  %s7 = ssub.s32 1, %s5
  %s8 = scalar_select 0, %s7, %s5
  loop: start=0, step=1, limit=4
  $region2: #{conv_bn_relu.2} parent=0 // loop_pre_header
    _
  $region3: #{conv_bn_relu.2} parent=0 // loop_header
    %s10 = sphi 0, %s14
    %p11 = scmp.ge.s32.totalorder %s10, 4
    %s20 = sphi 0, %s22
    %s23 = sphi 0, %s20
    %s24 = sphi 0, %s23
    %s40 = sphi 0, %s24
    %s44 = sphi 0, %s44
    %s46 = sphi 0, %s44
    %s47 = sphi 0, %s46
    %s61 = sphi 0, %s47
    %s67 = sphi 0, %s69
    %s70 = sphi 0, %s67
    %s71 = sphi 0, %s70
    %s87 = sphi 0, %s71
    %s93 = sphi 0, %s95
    %s96 = sphi 0, %s93
    %s97 = sphi 0, %s96
    %s113 = sphi 0, %s97
  $region4: #{conv_bn_relu.2} parent=0 // loop_header_branch
    %13 = sbr.rel (%p11) target = $region8
  $region5: #{conv_bn_relu.2} parent=0 // loop_body
    %s15 = ssub.s32 %s10, 1
    %s16 = ssub.s32 %s10, 2
    %s17 = sadd.s32 %s10, 1
    %s18 = ssub.s32 %s10, %s17
    %p19 = scmp.eq.s32.totalorder %s18, 0
    %s21 = sadd.s32 %s20, 1
    %s22 = scalar_select %p19, %s20, %s21
    %p25 = pneg %p19
    %p26 = scmp.eq.s32.totalorder %s10, 1
    %p27 = por %p25, %p26
    %p28 = scmp.ne.s32.totalorder %s20, %s23
    %p29 = scmp.eq.s32.totalorder %s10, 0
    %p30 = por %p28, %p29
    %p31 = scmp.ne.s32.totalorder %s20, %s23
    %p32 = scmp.eq.s32.totalorder %s15, 1
    %p33 = por %p31, %p32
    %p34 = scmp.ne.s32.totalorder %s23, %s24
    %p35 = scmp.eq.s32.totalorder %s15, 0
    %p36 = por %p34, %p35
    %p37 = scmp.ne.s32.totalorder %s23, %s24
    %p38 = scmp.eq.s32.totalorder %s16, 1
    %p39 = por %p37, %p38
    %p41 = scmp.ne.s32.totalorder %s24, %s40
    %p42 = scmp.eq.s32.totalorder %s16, 0
    %p43 = por %p41, %p42
    %s45 = sadd.s32 %s44, 1
    %p48 = scmp.eq.s32.totalorder %s10, 1
    %p49 = scmp.ne.s32.totalorder %s44, %s46
    %p50 = scmp.eq.s32.totalorder %s10, 0
    %p51 = por %p49, %p50
    %p52 = scmp.ne.s32.totalorder %s44, %s46
    %p53 = scmp.eq.s32.totalorder %s15, 1
    %p54 = por %p52, %p53
    %p55 = scmp.ne.s32.totalorder %s46, %s47
    %p56 = scmp.eq.s32.totalorder %s15, 0
    %p57 = por %p55, %p56
    %p58 = scmp.ne.s32.totalorder %s46, %s47
    %p59 = scmp.eq.s32.totalorder %s16, 1
    %p60 = por %p58, %p59
    %p62 = scmp.ne.s32.totalorder %s47, %s61
    %p63 = scmp.eq.s32.totalorder %s16, 0
    %p64 = por %p62, %p63
    %s65 = ssub.s32 %s10, %s17
    %p66 = scmp.eq.s32.totalorder %s65, 0
    %s68 = sadd.s32 %s67, 1
    %s69 = scalar_select %p66, %s67, %s68
    %p72 = pneg %p66
    %p73 = scmp.eq.s32.totalorder %s10, 1
    %p74 = por %p72, %p73
    %p75 = scmp.ne.s32.totalorder %s67, %s70
    %p76 = scmp.eq.s32.totalorder %s10, 0
    %p77 = por %p75, %p76
    %p78 = scmp.ne.s32.totalorder %s67, %s70
    %p79 = scmp.eq.s32.totalorder %s15, 1
    %p80 = por %p78, %p79
    %p81 = scmp.ne.s32.totalorder %s70, %s71
    %p82 = scmp.eq.s32.totalorder %s15, 0
    %p83 = por %p81, %p82
    %p84 = scmp.ne.s32.totalorder %s70, %s71
    %p85 = scmp.eq.s32.totalorder %s16, 1
    %p86 = por %p84, %p85
    %p88 = scmp.ne.s32.totalorder %s71, %s87
    %p89 = scmp.eq.s32.totalorder %s16, 0
    %p90 = por %p88, %p89
    %s91 = ssub.s32 %s10, %s17
    %p92 = scmp.eq.s32.totalorder %s91, 0
    %s94 = sadd.s32 %s93, 1
    %s95 = scalar_select %p92, %s93, %s94
    %p98 = pneg %p92
    %p99 = scmp.eq.s32.totalorder %s10, 1
    %p100 = por %p98, %p99
    %p101 = scmp.ne.s32.totalorder %s93, %s96
    %p102 = scmp.eq.s32.totalorder %s10, 0
    %p103 = por %p101, %p102
    %p104 = scmp.ne.s32.totalorder %s93, %s96
    %p105 = scmp.eq.s32.totalorder %s15, 1
    %p106 = por %p104, %p105
    %p107 = scmp.ne.s32.totalorder %s96, %s97
    %p108 = scmp.eq.s32.totalorder %s15, 0
    %p109 = por %p107, %p108
    %p110 = scmp.ne.s32.totalorder %s96, %s97
    %p111 = scmp.eq.s32.totalorder %s16, 1
    %p112 = por %p110, %p111
    %p114 = scmp.ne.s32.totalorder %s97, %s113
    %p115 = scmp.eq.s32.totalorder %s16, 0
    %p116 = por %p114, %p115
    %p117 = scmp.le.s32.totalorder 1, %s10
    %p118 = scmp.lt.s32.totalorder %s10, 3
    %p119 = pnand %p117, %p118
    %p120 = pneg %p119
    // Predicated region
    $region9: #{conv_bn_relu.2} parent=5 // pred_check
      _
    $region10: #{conv_bn_relu.2} parent=5 // pred_check_branch
      %122 = sbr.rel (%p119) target = $region12
    $region11: #{conv_bn_relu.2} parent=5 // pred_region
      %s123 = ssub.s32 %s10, 1
      // Predicated region
      $region13: #{conv_bn_relu.2} parent=11 // pred_check
        %p124 = pneg %p57
      $region14: #{conv_bn_relu.2} parent=11 // pred_check_branch
        %126 = sbr.rel (%p124) target = $region16
      $region15: #{conv_bn_relu.2} parent=11 // pred_region
        _
      $region16: #{conv_bn_relu.2} parent=11 // pred_fallthru
        _
    $region12: #{conv_bn_relu.2} parent=5 // pred_fallthru
      _
    %p127 = scmp.lt.s32.totalorder %s10, 2
    // Predicated region
    $region17: #{conv_bn_relu.2} parent=5 // pred_check
      %p128 = pneg %p127
    $region18: #{conv_bn_relu.2} parent=5 // pred_check_branch
      %130 = sbr.rel (%p128) target = $region20
    $region19: #{conv_bn_relu.2} parent=5 // pred_region
      // Predicated region
      $region21: #{conv_bn_relu.2} parent=19 // pred_check
        %p131 = pneg %p30
      $region22: #{conv_bn_relu.2} parent=19 // pred_check_branch
        %133 = sbr.rel (%p131) target = $region24
      $region23: #{conv_bn_relu.2} parent=19 // pred_region
        %p134 = scmp.lt.s32.totalorder %s10, 1
        %s135 = scalar_select %p134, %s10, 1
        %s136 = smul.addr %s135, 54
        %s137 = smul.addr %s136, 8
        %s138 = scalar_lea.vmem %s0, %s137
      $region24: #{conv_bn_relu.2} parent=19 // pred_fallthru
        _
    $region20: #{conv_bn_relu.2} parent=5 // pred_fallthru
      _
    %p139 = scmp.le.s32.totalorder 1, %s10
    %p140 = scmp.lt.s32.totalorder %s10, 3
    %p141 = pnand %p139, %p140
    %p142 = pneg %p141
    // Predicated region
    $region25: #{conv_bn_relu.2} parent=5 // pred_check
      _
    $region26: #{conv_bn_relu.2} parent=5 // pred_check_branch
      %144 = sbr.rel (%p141) target = $region28
    $region27: #{conv_bn_relu.2} parent=5 // pred_region
      %s145 = ssub.s32 %s10, 1
      %p146 = scmp.lt.s32.totalorder %s15, 1
      %s147 = scalar_select %p146, %s15, 1
      %s148 = smul.addr %s147, 54
      %s149 = smul.addr %s148, 8
      %s150 = scalar_lea.vmem %s0, %s149
      %p151 = pneg %p36
      %p152 = pneg %p33
      %p153 = pneg %p57
      %p154 = pneg %p54
      %p155 = pneg %p83
      %p156 = pneg %p80
      %p157 = scmp.lt.s32.totalorder %s15, 1
      %s158 = scalar_select %p157, %s15, 1
      %s159 = smul.addr %s158, 32
      %s160 = smul.addr %s159, 8
      %s161 = scalar_lea.vmem %s2, %s160
      %p162 = pneg %p109
      %p163 = pneg %p106
      %p164 = scmp.lt.s32.totalorder %s15, 1
      %s165 = scalar_select %p164, %s15, 1
      %s166 = smul.addr %s165, 2
      %s167 = scalar_lea.vmem %s3, %s166
      %p168 = scmp.lt.s32.totalorder %s15, 1
      %s169 = scalar_select %p168, %s15, 1
      %s170 = smul.addr %s169, 54
      %s171 = smul.addr %s170, 8
      %s172 = scalar_lea.vmem %s0, %s171
      %p173 = scmp.lt.s32.totalorder %s15, 1
      %s174 = scalar_select %p173, %s15, 1
      %s175 = smul.addr %s174, 32
      %s176 = smul.addr %s175, 8
      %s177 = scalar_lea.vmem %s2, %s176
      %p178 = scmp.lt.s32.totalorder %s15, 1
      %s179 = scalar_select %p178, %s15, 1
      %s180 = smul.addr %s179, 2
      %s181 = scalar_lea.vmem %s3, %s180
      %v182 = vld [vmem:[%s172] sm:$0xff]
      %v183 = vld [vmem:[%s172 + $0x8] sm:$0xff]
      %v184 = vld [vmem:[%s172 + $0x18] sm:$0xff]
      %v185 = vld [vmem:[%s172 + $0x20] sm:$0xff]
      %v186 = vld [vmem:[%s172 + $0x30] sm:$0xff]
      %v187 = vld [vmem:[%s172 + $0x38] sm:$0xff]
      %v188 = vld [vmem:[%s172 + $0x48] sm:$0xff]
      %v189 = vld [vmem:[%s172 + $0x50] sm:$0xff]
      %v190 = vld [vmem:[%s172 + $0x60] sm:$0xff]
      %v191 = vld [vmem:[%s172 + $0x68] sm:$0xff]
      %v192 = vld [vmem:[%s172 + $0x78] sm:$0xff]
      %v193 = vld [vmem:[%s172 + $0x80] sm:$0xff]
      %v194 = vld [vmem:[%s172 + $0x90] sm:$0xff]
      %v195 = vld [vmem:[%s172 + $0x98] sm:$0xff]
      %v196 = vld [vmem:[%s172 + $0xa8] sm:$0xff]
      %v197 = vld [vmem:[%s172 + $0xb0] sm:$0xff]
      %v198 = vld [vmem:[%s172 + $0xc0] sm:$0xff]
      %v199 = vld [vmem:[%s172 + $0xc8] sm:$0xff]
      %v200 = vld [vmem:[%s172 + $0xd8] sm:$0xff]
      %v201 = vld [vmem:[%s172 + $0xe0] sm:$0xff]
      %v202 = vld [vmem:[%s172 + $0xf0] sm:$0xff]
      %v203 = vld [vmem:[%s172 + $0xf8] sm:$0xff]
      %v204 = vld [vmem:[%s172 + $0x108] sm:$0xff]
      %v205 = vld [vmem:[%s172 + $0x110] sm:$0xff]
      %v206 = vld [vmem:[%s172 + $0x120] sm:$0xff]
      %v207 = vld [vmem:[%s172 + $0x128] sm:$0xff]
      %v208 = vld [vmem:[%s172 + $0x138] sm:$0xff]
      %v209 = vld [vmem:[%s172 + $0x140] sm:$0xff]
      %v210 = vld [vmem:[%s172 + $0x150] sm:$0xff]
      %v211 = vld [vmem:[%s172 + $0x158] sm:$0xff]
      %v212 = vld [vmem:[%s172 + $0x168] sm:$0xff]
      %v213 = vld [vmem:[%s172 + $0x170] sm:$0xff]
      %v214 = vld [vmem:[%s1] sm:$0xf]
      %v215 = vld [vmem:[%s172 + $0x1] sm:$0xff]
      %v216 = vld [vmem:[%s172 + $0x9] sm:$0xff]
      %v217 = vld [vmem:[%s172 + $0x19] sm:$0xff]
      %v218 = vld [vmem:[%s172 + $0x21] sm:$0xff]
      %v219 = vld [vmem:[%s172 + $0x31] sm:$0xff]
      %v220 = vld [vmem:[%s172 + $0x39] sm:$0xff]
      %v221 = vld [vmem:[%s172 + $0x49] sm:$0xff]
      %v222 = vld [vmem:[%s172 + $0x51] sm:$0xff]
      %v223 = vld [vmem:[%s172 + $0x61] sm:$0xff]
      %v224 = vld [vmem:[%s172 + $0x69] sm:$0xff]
      %v225 = vld [vmem:[%s172 + $0x79] sm:$0xff]
      %v226 = vld [vmem:[%s172 + $0x81] sm:$0xff]
      %v227 = vld [vmem:[%s172 + $0x91] sm:$0xff]
      %v228 = vld [vmem:[%s172 + $0x99] sm:$0xff]
      %v229 = vld [vmem:[%s172 + $0xa9] sm:$0xff]
      %v230 = vld [vmem:[%s172 + $0xb1] sm:$0xff]
      %v231 = vld [vmem:[%s172 + $0xc1] sm:$0xff]
      %v232 = vld [vmem:[%s172 + $0xc9] sm:$0xff]
      %v233 = vld [vmem:[%s172 + $0xd9] sm:$0xff]
      %v234 = vld [vmem:[%s172 + $0xe1] sm:$0xff]
      %v235 = vld [vmem:[%s172 + $0xf1] sm:$0xff]
      %v236 = vld [vmem:[%s172 + $0xf9] sm:$0xff]
      %v237 = vld [vmem:[%s172 + $0x109] sm:$0xff]
      %v238 = vld [vmem:[%s172 + $0x111] sm:$0xff]
      %v239 = vld [vmem:[%s172 + $0x121] sm:$0xff]
      %v240 = vld [vmem:[%s172 + $0x129] sm:$0xff]
      %v241 = vld [vmem:[%s172 + $0x139] sm:$0xff]
      %v242 = vld [vmem:[%s172 + $0x141] sm:$0xff]
      %v243 = vld [vmem:[%s172 + $0x151] sm:$0xff]
      %v244 = vld [vmem:[%s172 + $0x159] sm:$0xff]
      %v245 = vld [vmem:[%s172 + $0x169] sm:$0xff]
      %v246 = vld [vmem:[%s172 + $0x171] sm:$0xff]
      %s247 = scalar_lea.vmem %s1, 4
      %v248 = vld [vmem:[%s247] sm:$0xf]
      %vm249 = vcmask 31744
      %v251 = vsel %vm249, %v215, 0
      %v254 = vsel %vm249, %v216, 0
      %v257 = vsel %vm249, %v217, 0
      %v260 = vsel %vm249, %v218, 0
      %v263 = vsel %vm249, %v219, 0
      %v266 = vsel %vm249, %v220, 0
      %v269 = vsel %vm249, %v221, 0
      %v272 = vsel %vm249, %v222, 0
      %v275 = vsel %vm249, %v223, 0
      %v278 = vsel %vm249, %v224, 0
      %v281 = vsel %vm249, %v225, 0
      %v284 = vsel %vm249, %v226, 0
      %v287 = vsel %vm249, %v227, 0
      %v290 = vsel %vm249, %v228, 0
      %v293 = vsel %vm249, %v229, 0
      %v296 = vsel %vm249, %v230, 0
      %v299 = vsel %vm249, %v231, 0
      %v302 = vsel %vm249, %v232, 0
      %v305 = vsel %vm249, %v233, 0
      %v308 = vsel %vm249, %v234, 0
      %v311 = vsel %vm249, %v235, 0
      %v314 = vsel %vm249, %v236, 0
      %v317 = vsel %vm249, %v237, 0
      %v320 = vsel %vm249, %v238, 0
      %v323 = vsel %vm249, %v239, 0
      %v326 = vsel %vm249, %v240, 0
      %v329 = vsel %vm249, %v241, 0
      %v332 = vsel %vm249, %v242, 0
      %v335 = vsel %vm249, %v243, 0
      %v338 = vsel %vm249, %v244, 0
      %v341 = vsel %vm249, %v245, 0
      %v344 = vsel %vm249, %v246, 0
      %vm346 = vcmask 1043456
      %v348 = vsel %vm346, %v248, 0
      %350 = vmatpush.msra.mxu0 0.0
      %351 = vmatpush.msra.mxu0 0.0
      %352 = vmatpush.msra.mxu0 0.0
      %353 = vmatpush.msra.mxu0 0.0
      %354 = vmatpush.msra.mxu0 0.0
      %355 = vmatpush.msra.mxu0 0.0
      %356 = vmatpush.msra.mxu0 0.0
      %357 = vmatpush.msra.mxu0 0.0
      %358 = vmatpush.msra.mxu0 0.0
      %359 = vmatpush.msra.mxu0 0.0
      %360 = vmatpush.msra.mxu0 0.0
      %361 = vmatpush.msra.mxu0 0.0
      %362 = vmatpush.msra.mxu0 0.0
      %363 = vmatpush.msra.mxu0 0.0
      %364 = vmatpush.msra.mxu0 0.0
      %365 = vmatpush.msra.mxu0 %v348
      %366 = vmatmul.f32.gmra.mxu0 %v251
      %v367 = vpop.f32.mrf.mxu0
      %v368 = vadd.f32 0.0, %v367
      %369 = vmatmul.f32.gmra.mxu0 %v254
      %v370 = vpop.f32.mrf.mxu0
      %v371 = vadd.f32 0.0, %v370
      %372 = vmatmul.f32.gmra.mxu0 %v257
      %v373 = vpop.f32.mrf.mxu0
      %v374 = vadd.f32 0.0, %v373
      %375 = vmatmul.f32.gmra.mxu0 %v260
      %v376 = vpop.f32.mrf.mxu0
      %v377 = vadd.f32 0.0, %v376
      %378 = vmatmul.f32.gmra.mxu0 %v263
      %v379 = vpop.f32.mrf.mxu0
      %v380 = vadd.f32 0.0, %v379
      %381 = vmatmul.f32.gmra.mxu0 %v266
      %v382 = vpop.f32.mrf.mxu0
      %v383 = vadd.f32 0.0, %v382
      %384 = vmatmul.f32.gmra.mxu0 %v269
      %v385 = vpop.f32.mrf.mxu0
      %v386 = vadd.f32 0.0, %v385
      %387 = vmatmul.f32.gmra.mxu0 %v272
      %v388 = vpop.f32.mrf.mxu0
      %v389 = vadd.f32 0.0, %v388
      %390 = vmatmul.f32.gmra.mxu0 %v275
      %v391 = vpop.f32.mrf.mxu0
      %v392 = vadd.f32 0.0, %v391
      %393 = vmatmul.f32.gmra.mxu0 %v278
      %v394 = vpop.f32.mrf.mxu0
      %v395 = vadd.f32 0.0, %v394
      %396 = vmatmul.f32.gmra.mxu0 %v281
      %v397 = vpop.f32.mrf.mxu0
      %v398 = vadd.f32 0.0, %v397
      %399 = vmatmul.f32.gmra.mxu0 %v284
      %v400 = vpop.f32.mrf.mxu0
      %v401 = vadd.f32 0.0, %v400
      %402 = vmatmul.f32.gmra.mxu0 %v287
      %v403 = vpop.f32.mrf.mxu0
      %v404 = vadd.f32 0.0, %v403
      %405 = vmatmul.f32.gmra.mxu0 %v290
      %v406 = vpop.f32.mrf.mxu0
      %v407 = vadd.f32 0.0, %v406
      %408 = vmatmul.f32.gmra.mxu0 %v293
      %v409 = vpop.f32.mrf.mxu0
      %v410 = vadd.f32 0.0, %v409
      %411 = vmatmul.f32.gmra.mxu0 %v296
      %v412 = vpop.f32.mrf.mxu0
      %v413 = vadd.f32 0.0, %v412
      %414 = vmatmul.f32.gmra.mxu0 %v299
      %v415 = vpop.f32.mrf.mxu0
      %v416 = vadd.f32 0.0, %v415
      %417 = vmatmul.f32.gmra.mxu0 %v302
      %v418 = vpop.f32.mrf.mxu0
      %v419 = vadd.f32 0.0, %v418
      %420 = vmatmul.f32.gmra.mxu0 %v305
      %v421 = vpop.f32.mrf.mxu0
      %v422 = vadd.f32 0.0, %v421
      %423 = vmatmul.f32.gmra.mxu0 %v308
      %v424 = vpop.f32.mrf.mxu0
      %v425 = vadd.f32 0.0, %v424
      %426 = vmatmul.f32.gmra.mxu0 %v311
      %v427 = vpop.f32.mrf.mxu0
      %v428 = vadd.f32 0.0, %v427
      %429 = vmatmul.f32.gmra.mxu0 %v314
      %v430 = vpop.f32.mrf.mxu0
      %v431 = vadd.f32 0.0, %v430
      %432 = vmatmul.f32.gmra.mxu0 %v317
      %v433 = vpop.f32.mrf.mxu0
      %v434 = vadd.f32 0.0, %v433
      %435 = vmatmul.f32.gmra.mxu0 %v320
      %v436 = vpop.f32.mrf.mxu0
      %v437 = vadd.f32 0.0, %v436
      %438 = vmatmul.f32.gmra.mxu0 %v323
      %v439 = vpop.f32.mrf.mxu0
      %v440 = vadd.f32 0.0, %v439
      %441 = vmatmul.f32.gmra.mxu0 %v326
      %v442 = vpop.f32.mrf.mxu0
      %v443 = vadd.f32 0.0, %v442
      %444 = vmatmul.f32.gmra.mxu0 %v329
      %v445 = vpop.f32.mrf.mxu0
      %v446 = vadd.f32 0.0, %v445
      %447 = vmatmul.f32.gmra.mxu0 %v332
      %v448 = vpop.f32.mrf.mxu0
      %v449 = vadd.f32 0.0, %v448
      %450 = vmatmul.f32.gmra.mxu0 %v335
      %v451 = vpop.f32.mrf.mxu0
      %v452 = vadd.f32 0.0, %v451
      %453 = vmatmul.f32.gmra.mxu0 %v338
      %v454 = vpop.f32.mrf.mxu0
      %v455 = vadd.f32 0.0, %v454
      %456 = vmatmul.f32.gmra.mxu0 %v341
      %v457 = vpop.f32.mrf.mxu0
      %v458 = vadd.f32 0.0, %v457
      %459 = vmatmul.f32.gmra.mxu0 %v344
      %v460 = vpop.f32.mrf.mxu0
      %v461 = vadd.f32 0.0, %v460
      %462 = vdwg.mxu0
      %v464 = vsel %vm249, %v182, 0
      %v467 = vsel %vm249, %v183, 0
      %v470 = vsel %vm249, %v184, 0
      %v473 = vsel %vm249, %v185, 0
      %v476 = vsel %vm249, %v186, 0
      %v479 = vsel %vm249, %v187, 0
      %v482 = vsel %vm249, %v188, 0
      %v485 = vsel %vm249, %v189, 0
      %v488 = vsel %vm249, %v190, 0
      %v491 = vsel %vm249, %v191, 0
      %v494 = vsel %vm249, %v192, 0
      %v497 = vsel %vm249, %v193, 0
      %v500 = vsel %vm249, %v194, 0
      %v503 = vsel %vm249, %v195, 0
      %v506 = vsel %vm249, %v196, 0
      %v509 = vsel %vm249, %v197, 0
      %v512 = vsel %vm249, %v198, 0
      %v515 = vsel %vm249, %v199, 0
      %v518 = vsel %vm249, %v200, 0
      %v521 = vsel %vm249, %v201, 0
      %v524 = vsel %vm249, %v202, 0
      %v527 = vsel %vm249, %v203, 0
      %v530 = vsel %vm249, %v204, 0
      %v533 = vsel %vm249, %v205, 0
      %v536 = vsel %vm249, %v206, 0
      %v539 = vsel %vm249, %v207, 0
      %v542 = vsel %vm249, %v208, 0
      %v545 = vsel %vm249, %v209, 0
      %v548 = vsel %vm249, %v210, 0
      %v551 = vsel %vm249, %v211, 0
      %v554 = vsel %vm249, %v212, 0
      %v557 = vsel %vm249, %v213, 0
      %v560 = vsel %vm346, %v214, 0
      %562 = vmatpush.msra.mxu0 0.0
      %563 = vmatpush.msra.mxu0 0.0
      %564 = vmatpush.msra.mxu0 0.0
      %565 = vmatpush.msra.mxu0 0.0
      %566 = vmatpush.msra.mxu0 0.0
      %567 = vmatpush.msra.mxu0 0.0
      %568 = vmatpush.msra.mxu0 0.0
      %569 = vmatpush.msra.mxu0 0.0
      %570 = vmatpush.msra.mxu0 0.0
      %571 = vmatpush.msra.mxu0 0.0
      %572 = vmatpush.msra.mxu0 0.0
      %573 = vmatpush.msra.mxu0 0.0
      %574 = vmatpush.msra.mxu0 0.0
      %575 = vmatpush.msra.mxu0 0.0
      %576 = vmatpush.msra.mxu0 0.0
      %577 = vmatpush.msra.mxu0 %v560
      %578 = vmatmul.f32.gmra.mxu0 %v464
      %v579 = vpop.f32.mrf.mxu0
      %v580 = vadd.f32 %v368, %v579
      %581 = vmatmul.f32.gmra.mxu0 %v467
      %v582 = vpop.f32.mrf.mxu0
      %v583 = vadd.f32 %v371, %v582
      %584 = vmatmul.f32.gmra.mxu0 %v470
      %v585 = vpop.f32.mrf.mxu0
      %v586 = vadd.f32 %v374, %v585
      %587 = vmatmul.f32.gmra.mxu0 %v473
      %v588 = vpop.f32.mrf.mxu0
      %v589 = vadd.f32 %v377, %v588
      %590 = vmatmul.f32.gmra.mxu0 %v476
      %v591 = vpop.f32.mrf.mxu0
      %v592 = vadd.f32 %v380, %v591
      %593 = vmatmul.f32.gmra.mxu0 %v479
      %v594 = vpop.f32.mrf.mxu0
      %v595 = vadd.f32 %v383, %v594
      %596 = vmatmul.f32.gmra.mxu0 %v482
      %v597 = vpop.f32.mrf.mxu0
      %v598 = vadd.f32 %v386, %v597
      %599 = vmatmul.f32.gmra.mxu0 %v485
      %v600 = vpop.f32.mrf.mxu0
      %v601 = vadd.f32 %v389, %v600
      %602 = vmatmul.f32.gmra.mxu0 %v488
      %v603 = vpop.f32.mrf.mxu0
      %v604 = vadd.f32 %v392, %v603
      %605 = vmatmul.f32.gmra.mxu0 %v491
      %v606 = vpop.f32.mrf.mxu0
      %v607 = vadd.f32 %v395, %v606
      %608 = vmatmul.f32.gmra.mxu0 %v494
      %v609 = vpop.f32.mrf.mxu0
      %v610 = vadd.f32 %v398, %v609
      %611 = vmatmul.f32.gmra.mxu0 %v497
      %v612 = vpop.f32.mrf.mxu0
      %v613 = vadd.f32 %v401, %v612
      %614 = vmatmul.f32.gmra.mxu0 %v500
      %v615 = vpop.f32.mrf.mxu0
      %v616 = vadd.f32 %v404, %v615
      %617 = vmatmul.f32.gmra.mxu0 %v503
      %v618 = vpop.f32.mrf.mxu0
      %v619 = vadd.f32 %v407, %v618
      %620 = vmatmul.f32.gmra.mxu0 %v506
      %v621 = vpop.f32.mrf.mxu0
      %v622 = vadd.f32 %v410, %v621
      %623 = vmatmul.f32.gmra.mxu0 %v509
      %v624 = vpop.f32.mrf.mxu0
      %v625 = vadd.f32 %v413, %v624
      %626 = vmatmul.f32.gmra.mxu0 %v512
      %v627 = vpop.f32.mrf.mxu0
      %v628 = vadd.f32 %v416, %v627
      %629 = vmatmul.f32.gmra.mxu0 %v515
      %v630 = vpop.f32.mrf.mxu0
      %v631 = vadd.f32 %v419, %v630
      %632 = vmatmul.f32.gmra.mxu0 %v518
      %v633 = vpop.f32.mrf.mxu0
      %v634 = vadd.f32 %v422, %v633
      %635 = vmatmul.f32.gmra.mxu0 %v521
      %v636 = vpop.f32.mrf.mxu0
      %v637 = vadd.f32 %v425, %v636
      %638 = vmatmul.f32.gmra.mxu0 %v524
      %v639 = vpop.f32.mrf.mxu0
      %v640 = vadd.f32 %v428, %v639
      %641 = vmatmul.f32.gmra.mxu0 %v527
      %v642 = vpop.f32.mrf.mxu0
      %v643 = vadd.f32 %v431, %v642
      %644 = vmatmul.f32.gmra.mxu0 %v530
      %v645 = vpop.f32.mrf.mxu0
      %v646 = vadd.f32 %v434, %v645
      %647 = vmatmul.f32.gmra.mxu0 %v533
      %v648 = vpop.f32.mrf.mxu0
      %v649 = vadd.f32 %v437, %v648
      %650 = vmatmul.f32.gmra.mxu0 %v536
      %v651 = vpop.f32.mrf.mxu0
      %v652 = vadd.f32 %v440, %v651
      %653 = vmatmul.f32.gmra.mxu0 %v539
      %v654 = vpop.f32.mrf.mxu0
      %v655 = vadd.f32 %v443, %v654
      %656 = vmatmul.f32.gmra.mxu0 %v542
      %v657 = vpop.f32.mrf.mxu0
      %v658 = vadd.f32 %v446, %v657
      %659 = vmatmul.f32.gmra.mxu0 %v545
      %v660 = vpop.f32.mrf.mxu0
      %v661 = vadd.f32 %v449, %v660
      %662 = vmatmul.f32.gmra.mxu0 %v548
      %v663 = vpop.f32.mrf.mxu0
      %v664 = vadd.f32 %v452, %v663
      %665 = vmatmul.f32.gmra.mxu0 %v551
      %v666 = vpop.f32.mrf.mxu0
      %v667 = vadd.f32 %v455, %v666
      %668 = vmatmul.f32.gmra.mxu0 %v554
      %v669 = vpop.f32.mrf.mxu0
      %v670 = vadd.f32 %v458, %v669
      %671 = vmatmul.f32.gmra.mxu0 %v557
      %v672 = vpop.f32.mrf.mxu0
      %v673 = vadd.f32 %v461, %v672
      %674 = vdwg.mxu0
      %v675 = vld [vmem:[%s172 + $0x2] sm:$0xff]
      %v676 = vld [vmem:[%s172 + $0xa] sm:$0xff]
      %v677 = vld [vmem:[%s172 + $0x1a] sm:$0xff]
      %v678 = vld [vmem:[%s172 + $0x22] sm:$0xff]
      %v679 = vld [vmem:[%s172 + $0x32] sm:$0xff]
      %v680 = vld [vmem:[%s172 + $0x3a] sm:$0xff]
      %v681 = vld [vmem:[%s172 + $0x4a] sm:$0xff]
      %v682 = vld [vmem:[%s172 + $0x52] sm:$0xff]
      %v683 = vld [vmem:[%s172 + $0x62] sm:$0xff]
      %v684 = vld [vmem:[%s172 + $0x6a] sm:$0xff]
      %v685 = vld [vmem:[%s172 + $0x7a] sm:$0xff]
      %v686 = vld [vmem:[%s172 + $0x82] sm:$0xff]
      %v687 = vld [vmem:[%s172 + $0x92] sm:$0xff]
      %v688 = vld [vmem:[%s172 + $0x9a] sm:$0xff]
      %v689 = vld [vmem:[%s172 + $0xaa] sm:$0xff]
      %v690 = vld [vmem:[%s172 + $0xb2] sm:$0xff]
      %v691 = vld [vmem:[%s172 + $0xc2] sm:$0xff]
      %v692 = vld [vmem:[%s172 + $0xca] sm:$0xff]
      %v693 = vld [vmem:[%s172 + $0xda] sm:$0xff]
      %v694 = vld [vmem:[%s172 + $0xe2] sm:$0xff]
      %v695 = vld [vmem:[%s172 + $0xf2] sm:$0xff]
      %v696 = vld [vmem:[%s172 + $0xfa] sm:$0xff]
      %v697 = vld [vmem:[%s172 + $0x10a] sm:$0xff]
      %v698 = vld [vmem:[%s172 + $0x112] sm:$0xff]
      %v699 = vld [vmem:[%s172 + $0x122] sm:$0xff]
      %v700 = vld [vmem:[%s172 + $0x12a] sm:$0xff]
      %v701 = vld [vmem:[%s172 + $0x13a] sm:$0xff]
      %v702 = vld [vmem:[%s172 + $0x142] sm:$0xff]
      %v703 = vld [vmem:[%s172 + $0x152] sm:$0xff]
      %v704 = vld [vmem:[%s172 + $0x15a] sm:$0xff]
      %v705 = vld [vmem:[%s172 + $0x16a] sm:$0xff]
      %v706 = vld [vmem:[%s172 + $0x172] sm:$0xff]
      %s707 = scalar_lea.vmem %s1, 8
      %v708 = vld [vmem:[%s707] sm:$0xf]
      %v710 = vsel %vm249, %v675, 0
      %v713 = vsel %vm249, %v676, 0
      %v716 = vsel %vm249, %v677, 0
      %v719 = vsel %vm249, %v678, 0
      %v722 = vsel %vm249, %v679, 0
      %v725 = vsel %vm249, %v680, 0
      %v728 = vsel %vm249, %v681, 0
      %v731 = vsel %vm249, %v682, 0
      %v734 = vsel %vm249, %v683, 0
      %v737 = vsel %vm249, %v684, 0
      %v740 = vsel %vm249, %v685, 0
      %v743 = vsel %vm249, %v686, 0
      %v746 = vsel %vm249, %v687, 0
      %v749 = vsel %vm249, %v688, 0
      %v752 = vsel %vm249, %v689, 0
      %v755 = vsel %vm249, %v690, 0
      %v758 = vsel %vm249, %v691, 0
      %v761 = vsel %vm249, %v692, 0
      %v764 = vsel %vm249, %v693, 0
      %v767 = vsel %vm249, %v694, 0
      %v770 = vsel %vm249, %v695, 0
      %v773 = vsel %vm249, %v696, 0
      %v776 = vsel %vm249, %v697, 0
      %v779 = vsel %vm249, %v698, 0
      %v782 = vsel %vm249, %v699, 0
      %v785 = vsel %vm249, %v700, 0
      %v788 = vsel %vm249, %v701, 0
      %v791 = vsel %vm249, %v702, 0
      %v794 = vsel %vm249, %v703, 0
      %v797 = vsel %vm249, %v704, 0
      %v800 = vsel %vm249, %v705, 0
      %v803 = vsel %vm249, %v706, 0
      %v806 = vsel %vm346, %v708, 0
      %808 = vmatpush.msra.mxu0 0.0
      %809 = vmatpush.msra.mxu0 0.0
      %810 = vmatpush.msra.mxu0 0.0
      %811 = vmatpush.msra.mxu0 0.0
      %812 = vmatpush.msra.mxu0 0.0
      %813 = vmatpush.msra.mxu0 0.0
      %814 = vmatpush.msra.mxu0 0.0
      %815 = vmatpush.msra.mxu0 0.0
      %816 = vmatpush.msra.mxu0 0.0
      %817 = vmatpush.msra.mxu0 0.0
      %818 = vmatpush.msra.mxu0 0.0
      %819 = vmatpush.msra.mxu0 0.0
      %820 = vmatpush.msra.mxu0 0.0
      %821 = vmatpush.msra.mxu0 0.0
      %822 = vmatpush.msra.mxu0 0.0
      %823 = vmatpush.msra.mxu0 %v806
      %824 = vmatmul.f32.gmra.mxu0 %v710
      %v825 = vpop.f32.mrf.mxu0
      %v826 = vadd.f32 0.0, %v825
      %827 = vmatmul.f32.gmra.mxu0 %v713
      %v828 = vpop.f32.mrf.mxu0
      %v829 = vadd.f32 0.0, %v828
      %830 = vmatmul.f32.gmra.mxu0 %v716
      %v831 = vpop.f32.mrf.mxu0
      %v832 = vadd.f32 0.0, %v831
      %833 = vmatmul.f32.gmra.mxu0 %v719
      %v834 = vpop.f32.mrf.mxu0
      %v835 = vadd.f32 0.0, %v834
      %836 = vmatmul.f32.gmra.mxu0 %v722
      %v837 = vpop.f32.mrf.mxu0
      %v838 = vadd.f32 0.0, %v837
      %839 = vmatmul.f32.gmra.mxu0 %v725
      %v840 = vpop.f32.mrf.mxu0
      %v841 = vadd.f32 0.0, %v840
      %842 = vmatmul.f32.gmra.mxu0 %v728
      %v843 = vpop.f32.mrf.mxu0
      %v844 = vadd.f32 0.0, %v843
      %845 = vmatmul.f32.gmra.mxu0 %v731
      %v846 = vpop.f32.mrf.mxu0
      %v847 = vadd.f32 0.0, %v846
      %848 = vmatmul.f32.gmra.mxu0 %v734
      %v849 = vpop.f32.mrf.mxu0
      %v850 = vadd.f32 0.0, %v849
      %851 = vmatmul.f32.gmra.mxu0 %v737
      %v852 = vpop.f32.mrf.mxu0
      %v853 = vadd.f32 0.0, %v852
      %854 = vmatmul.f32.gmra.mxu0 %v740
      %v855 = vpop.f32.mrf.mxu0
      %v856 = vadd.f32 0.0, %v855
      %857 = vmatmul.f32.gmra.mxu0 %v743
      %v858 = vpop.f32.mrf.mxu0
      %v859 = vadd.f32 0.0, %v858
      %860 = vmatmul.f32.gmra.mxu0 %v746
      %v861 = vpop.f32.mrf.mxu0
      %v862 = vadd.f32 0.0, %v861
      %863 = vmatmul.f32.gmra.mxu0 %v749
      %v864 = vpop.f32.mrf.mxu0
      %v865 = vadd.f32 0.0, %v864
      %866 = vmatmul.f32.gmra.mxu0 %v752
      %v867 = vpop.f32.mrf.mxu0
      %v868 = vadd.f32 0.0, %v867
      %869 = vmatmul.f32.gmra.mxu0 %v755
      %v870 = vpop.f32.mrf.mxu0
      %v871 = vadd.f32 0.0, %v870
      %872 = vmatmul.f32.gmra.mxu0 %v758
      %v873 = vpop.f32.mrf.mxu0
      %v874 = vadd.f32 0.0, %v873
      %875 = vmatmul.f32.gmra.mxu0 %v761
      %v876 = vpop.f32.mrf.mxu0
      %v877 = vadd.f32 0.0, %v876
      %878 = vmatmul.f32.gmra.mxu0 %v764
      %v879 = vpop.f32.mrf.mxu0
      %v880 = vadd.f32 0.0, %v879
      %881 = vmatmul.f32.gmra.mxu0 %v767
      %v882 = vpop.f32.mrf.mxu0
      %v883 = vadd.f32 0.0, %v882
      %884 = vmatmul.f32.gmra.mxu0 %v770
      %v885 = vpop.f32.mrf.mxu0
      %v886 = vadd.f32 0.0, %v885
      %887 = vmatmul.f32.gmra.mxu0 %v773
      %v888 = vpop.f32.mrf.mxu0
      %v889 = vadd.f32 0.0, %v888
      %890 = vmatmul.f32.gmra.mxu0 %v776
      %v891 = vpop.f32.mrf.mxu0
      %v892 = vadd.f32 0.0, %v891
      %893 = vmatmul.f32.gmra.mxu0 %v779
      %v894 = vpop.f32.mrf.mxu0
      %v895 = vadd.f32 0.0, %v894
      %896 = vmatmul.f32.gmra.mxu0 %v782
      %v897 = vpop.f32.mrf.mxu0
      %v898 = vadd.f32 0.0, %v897
      %899 = vmatmul.f32.gmra.mxu0 %v785
      %v900 = vpop.f32.mrf.mxu0
      %v901 = vadd.f32 0.0, %v900
      %902 = vmatmul.f32.gmra.mxu0 %v788
      %v903 = vpop.f32.mrf.mxu0
      %v904 = vadd.f32 0.0, %v903
      %905 = vmatmul.f32.gmra.mxu0 %v791
      %v906 = vpop.f32.mrf.mxu0
      %v907 = vadd.f32 0.0, %v906
      %908 = vmatmul.f32.gmra.mxu0 %v794
      %v909 = vpop.f32.mrf.mxu0
      %v910 = vadd.f32 0.0, %v909
      %911 = vmatmul.f32.gmra.mxu0 %v797
      %v912 = vpop.f32.mrf.mxu0
      %v913 = vadd.f32 0.0, %v912
      %914 = vmatmul.f32.gmra.mxu0 %v800
      %v915 = vpop.f32.mrf.mxu0
      %v916 = vadd.f32 0.0, %v915
      %917 = vmatmul.f32.gmra.mxu0 %v803
      %v918 = vpop.f32.mrf.mxu0
      %v919 = vadd.f32 0.0, %v918
      %920 = vdwg.mxu0
      %v921 = vadd.f32 %v580, %v826
      %v922 = vadd.f32 %v583, %v829
      %v923 = vadd.f32 %v586, %v832
      %v924 = vadd.f32 %v589, %v835
      %v925 = vadd.f32 %v592, %v838
      %v926 = vadd.f32 %v595, %v841
      %v927 = vadd.f32 %v598, %v844
      %v928 = vadd.f32 %v601, %v847
      %v929 = vadd.f32 %v604, %v850
      %v930 = vadd.f32 %v607, %v853
      %v931 = vadd.f32 %v610, %v856
      %v932 = vadd.f32 %v613, %v859
      %v933 = vadd.f32 %v616, %v862
      %v934 = vadd.f32 %v619, %v865
      %v935 = vadd.f32 %v622, %v868
      %v936 = vadd.f32 %v625, %v871
      %v937 = vadd.f32 %v628, %v874
      %v938 = vadd.f32 %v631, %v877
      %v939 = vadd.f32 %v634, %v880
      %v940 = vadd.f32 %v637, %v883
      %v941 = vadd.f32 %v640, %v886
      %v942 = vadd.f32 %v643, %v889
      %v943 = vadd.f32 %v646, %v892
      %v944 = vadd.f32 %v649, %v895
      %v945 = vadd.f32 %v652, %v898
      %v946 = vadd.f32 %v655, %v901
      %v947 = vadd.f32 %v658, %v904
      %v948 = vadd.f32 %v661, %v907
      %v949 = vadd.f32 %v664, %v910
      %v950 = vadd.f32 %v667, %v913
      %v951 = vadd.f32 %v670, %v916
      %v952 = vadd.f32 %v673, %v919
      %s953 = scalar_lea.vmem %s172, 24
      %v954 = vld [vmem:[%s953] sm:$0xff]
      %v955 = vld [vmem:[%s953 + $0x8] sm:$0xff]
      %v956 = vld [vmem:[%s953 + $0x18] sm:$0xff]
      %v957 = vld [vmem:[%s953 + $0x20] sm:$0xff]
      %v958 = vld [vmem:[%s953 + $0x30] sm:$0xff]
      %v959 = vld [vmem:[%s953 + $0x38] sm:$0xff]
      %v960 = vld [vmem:[%s953 + $0x48] sm:$0xff]
      %v961 = vld [vmem:[%s953 + $0x50] sm:$0xff]
      %v962 = vld [vmem:[%s953 + $0x60] sm:$0xff]
      %v963 = vld [vmem:[%s953 + $0x68] sm:$0xff]
      %v964 = vld [vmem:[%s953 + $0x78] sm:$0xff]
      %v965 = vld [vmem:[%s953 + $0x80] sm:$0xff]
      %v966 = vld [vmem:[%s953 + $0x90] sm:$0xff]
      %v967 = vld [vmem:[%s953 + $0x98] sm:$0xff]
      %v968 = vld [vmem:[%s953 + $0xa8] sm:$0xff]
      %v969 = vld [vmem:[%s953 + $0xb0] sm:$0xff]
      %v970 = vld [vmem:[%s953 + $0xc0] sm:$0xff]
      %v971 = vld [vmem:[%s953 + $0xc8] sm:$0xff]
      %v972 = vld [vmem:[%s953 + $0xd8] sm:$0xff]
      %v973 = vld [vmem:[%s953 + $0xe0] sm:$0xff]
      %v974 = vld [vmem:[%s953 + $0xf0] sm:$0xff]
      %v975 = vld [vmem:[%s953 + $0xf8] sm:$0xff]
      %v976 = vld [vmem:[%s953 + $0x108] sm:$0xff]
      %v977 = vld [vmem:[%s953 + $0x110] sm:$0xff]
      %v978 = vld [vmem:[%s953 + $0x120] sm:$0xff]
      %v979 = vld [vmem:[%s953 + $0x128] sm:$0xff]
      %v980 = vld [vmem:[%s953 + $0x138] sm:$0xff]
      %v981 = vld [vmem:[%s953 + $0x140] sm:$0xff]
      %v982 = vld [vmem:[%s953 + $0x150] sm:$0xff]
      %v983 = vld [vmem:[%s953 + $0x158] sm:$0xff]
      %v984 = vld [vmem:[%s953 + $0x168] sm:$0xff]
      %v985 = vld [vmem:[%s953 + $0x170] sm:$0xff]
      %s986 = scalar_lea.vmem %s1, 12
      %v987 = vld [vmem:[%s986] sm:$0xf]
      %v989 = vsel %vm249, %v954, 0
      %v992 = vsel %vm249, %v955, 0
      %v995 = vsel %vm249, %v956, 0
      %v998 = vsel %vm249, %v957, 0
      %v1001 = vsel %vm249, %v958, 0
      %v1004 = vsel %vm249, %v959, 0
      %v1007 = vsel %vm249, %v960, 0
      %v1010 = vsel %vm249, %v961, 0
      %v1013 = vsel %vm249, %v962, 0
      %v1016 = vsel %vm249, %v963, 0
      %v1019 = vsel %vm249, %v964, 0
      %v1022 = vsel %vm249, %v965, 0
      %v1025 = vsel %vm249, %v966, 0
      %v1028 = vsel %vm249, %v967, 0
      %v1031 = vsel %vm249, %v968, 0
      %v1034 = vsel %vm249, %v969, 0
      %v1037 = vsel %vm249, %v970, 0
      %v1040 = vsel %vm249, %v971, 0
      %v1043 = vsel %vm249, %v972, 0
      %v1046 = vsel %vm249, %v973, 0
      %v1049 = vsel %vm249, %v974, 0
      %v1052 = vsel %vm249, %v975, 0
      %v1055 = vsel %vm249, %v976, 0
      %v1058 = vsel %vm249, %v977, 0
      %v1061 = vsel %vm249, %v978, 0
      %v1064 = vsel %vm249, %v979, 0
      %v1067 = vsel %vm249, %v980, 0
      %v1070 = vsel %vm249, %v981, 0
      %v1073 = vsel %vm249, %v982, 0
      %v1076 = vsel %vm249, %v983, 0
      %v1079 = vsel %vm249, %v984, 0
      %v1082 = vsel %vm249, %v985, 0
      %v1085 = vsel %vm346, %v987, 0
      %1087 = vmatpush.msra.mxu0 0.0
      %1088 = vmatpush.msra.mxu0 0.0
      %1089 = vmatpush.msra.mxu0 0.0
      %1090 = vmatpush.msra.mxu0 0.0
      %1091 = vmatpush.msra.mxu0 0.0
      %1092 = vmatpush.msra.mxu0 0.0
      %1093 = vmatpush.msra.mxu0 0.0
      %1094 = vmatpush.msra.mxu0 0.0
      %1095 = vmatpush.msra.mxu0 0.0
      %1096 = vmatpush.msra.mxu0 0.0
      %1097 = vmatpush.msra.mxu0 0.0
      %1098 = vmatpush.msra.mxu0 0.0
      %1099 = vmatpush.msra.mxu0 0.0
      %1100 = vmatpush.msra.mxu0 0.0
      %1101 = vmatpush.msra.mxu0 0.0
      %1102 = vmatpush.msra.mxu0 %v1085
      %1103 = vmatmul.f32.gmra.mxu0 %v989
      %v1104 = vpop.f32.mrf.mxu0
      %v1105 = vadd.f32 0.0, %v1104
      %1106 = vmatmul.f32.gmra.mxu0 %v992
      %v1107 = vpop.f32.mrf.mxu0
      %v1108 = vadd.f32 0.0, %v1107
      %1109 = vmatmul.f32.gmra.mxu0 %v995
      %v1110 = vpop.f32.mrf.mxu0
      %v1111 = vadd.f32 0.0, %v1110
      %1112 = vmatmul.f32.gmra.mxu0 %v998
      %v1113 = vpop.f32.mrf.mxu0
      %v1114 = vadd.f32 0.0, %v1113
      %1115 = vmatmul.f32.gmra.mxu0 %v1001
      %v1116 = vpop.f32.mrf.mxu0
      %v1117 = vadd.f32 0.0, %v1116
      %1118 = vmatmul.f32.gmra.mxu0 %v1004
      %v1119 = vpop.f32.mrf.mxu0
      %v1120 = vadd.f32 0.0, %v1119
      %1121 = vmatmul.f32.gmra.mxu0 %v1007
      %v1122 = vpop.f32.mrf.mxu0
      %v1123 = vadd.f32 0.0, %v1122
      %1124 = vmatmul.f32.gmra.mxu0 %v1010
      %v1125 = vpop.f32.mrf.mxu0
      %v1126 = vadd.f32 0.0, %v1125
      %1127 = vmatmul.f32.gmra.mxu0 %v1013
      %v1128 = vpop.f32.mrf.mxu0
      %v1129 = vadd.f32 0.0, %v1128
      %1130 = vmatmul.f32.gmra.mxu0 %v1016
      %v1131 = vpop.f32.mrf.mxu0
      %v1132 = vadd.f32 0.0, %v1131
      %1133 = vmatmul.f32.gmra.mxu0 %v1019
      %v1134 = vpop.f32.mrf.mxu0
      %v1135 = vadd.f32 0.0, %v1134
      %1136 = vmatmul.f32.gmra.mxu0 %v1022
      %v1137 = vpop.f32.mrf.mxu0
      %v1138 = vadd.f32 0.0, %v1137
      %1139 = vmatmul.f32.gmra.mxu0 %v1025
      %v1140 = vpop.f32.mrf.mxu0
      %v1141 = vadd.f32 0.0, %v1140
      %1142 = vmatmul.f32.gmra.mxu0 %v1028
      %v1143 = vpop.f32.mrf.mxu0
      %v1144 = vadd.f32 0.0, %v1143
      %1145 = vmatmul.f32.gmra.mxu0 %v1031
      %v1146 = vpop.f32.mrf.mxu0
      %v1147 = vadd.f32 0.0, %v1146
      %1148 = vmatmul.f32.gmra.mxu0 %v1034
      %v1149 = vpop.f32.mrf.mxu0
      %v1150 = vadd.f32 0.0, %v1149
      %1151 = vmatmul.f32.gmra.mxu0 %v1037
      %v1152 = vpop.f32.mrf.mxu0
      %v1153 = vadd.f32 0.0, %v1152
      %1154 = vmatmul.f32.gmra.mxu0 %v1040
      %v1155 = vpop.f32.mrf.mxu0
      %v1156 = vadd.f32 0.0, %v1155
      %1157 = vmatmul.f32.gmra.mxu0 %v1043
      %v1158 = vpop.f32.mrf.mxu0
      %v1159 = vadd.f32 0.0, %v1158
      %1160 = vmatmul.f32.gmra.mxu0 %v1046
      %v1161 = vpop.f32.mrf.mxu0
      %v1162 = vadd.f32 0.0, %v1161
      %1163 = vmatmul.f32.gmra.mxu0 %v1049
      %v1164 = vpop.f32.mrf.mxu0
      %v1165 = vadd.f32 0.0, %v1164
      %1166 = vmatmul.f32.gmra.mxu0 %v1052
      %v1167 = vpop.f32.mrf.mxu0
      %v1168 = vadd.f32 0.0, %v1167
      %1169 = vmatmul.f32.gmra.mxu0 %v1055
      %v1170 = vpop.f32.mrf.mxu0
      %v1171 = vadd.f32 0.0, %v1170
      %1172 = vmatmul.f32.gmra.mxu0 %v1058
      %v1173 = vpop.f32.mrf.mxu0
      %v1174 = vadd.f32 0.0, %v1173
      %1175 = vmatmul.f32.gmra.mxu0 %v1061
      %v1176 = vpop.f32.mrf.mxu0
      %v1177 = vadd.f32 0.0, %v1176
      %1178 = vmatmul.f32.gmra.mxu0 %v1064
      %v1179 = vpop.f32.mrf.mxu0
      %v1180 = vadd.f32 0.0, %v1179
      %1181 = vmatmul.f32.gmra.mxu0 %v1067
      %v1182 = vpop.f32.mrf.mxu0
      %v1183 = vadd.f32 0.0, %v1182
      %1184 = vmatmul.f32.gmra.mxu0 %v1070
      %v1185 = vpop.f32.mrf.mxu0
      %v1186 = vadd.f32 0.0, %v1185
      %1187 = vmatmul.f32.gmra.mxu0 %v1073
      %v1188 = vpop.f32.mrf.mxu0
      %v1189 = vadd.f32 0.0, %v1188
      %1190 = vmatmul.f32.gmra.mxu0 %v1076
      %v1191 = vpop.f32.mrf.mxu0
      %v1192 = vadd.f32 0.0, %v1191
      %1193 = vmatmul.f32.gmra.mxu0 %v1079
      %v1194 = vpop.f32.mrf.mxu0
      %v1195 = vadd.f32 0.0, %v1194
      %1196 = vmatmul.f32.gmra.mxu0 %v1082
      %v1197 = vpop.f32.mrf.mxu0
      %v1198 = vadd.f32 0.0, %v1197
      %1199 = vdwg.mxu0
      %v1200 = vadd.f32 %v921, %v1105
      %v1201 = vadd.f32 %v922, %v1108
      %v1202 = vadd.f32 %v923, %v1111
      %v1203 = vadd.f32 %v924, %v1114
      %v1204 = vadd.f32 %v925, %v1117
      %v1205 = vadd.f32 %v926, %v1120
      %v1206 = vadd.f32 %v927, %v1123
      %v1207 = vadd.f32 %v928, %v1126
      %v1208 = vadd.f32 %v929, %v1129
      %v1209 = vadd.f32 %v930, %v1132
      %v1210 = vadd.f32 %v931, %v1135
      %v1211 = vadd.f32 %v932, %v1138
      %v1212 = vadd.f32 %v933, %v1141
      %v1213 = vadd.f32 %v934, %v1144
      %v1214 = vadd.f32 %v935, %v1147
      %v1215 = vadd.f32 %v936, %v1150
      %v1216 = vadd.f32 %v937, %v1153
      %v1217 = vadd.f32 %v938, %v1156
      %v1218 = vadd.f32 %v939, %v1159
      %v1219 = vadd.f32 %v940, %v1162
      %v1220 = vadd.f32 %v941, %v1165
      %v1221 = vadd.f32 %v942, %v1168
      %v1222 = vadd.f32 %v943, %v1171
      %v1223 = vadd.f32 %v944, %v1174
      %v1224 = vadd.f32 %v945, %v1177
      %v1225 = vadd.f32 %v946, %v1180
      %v1226 = vadd.f32 %v947, %v1183
      %v1227 = vadd.f32 %v948, %v1186
      %v1228 = vadd.f32 %v949, %v1189
      %v1229 = vadd.f32 %v950, %v1192
      %v1230 = vadd.f32 %v951, %v1195
      %v1231 = vadd.f32 %v952, %v1198
      %v1232 = vld [vmem:[%s953 + $0x1] sm:$0xff]
      %v1233 = vld [vmem:[%s953 + $0x9] sm:$0xff]
      %v1234 = vld [vmem:[%s953 + $0x19] sm:$0xff]
      %v1235 = vld [vmem:[%s953 + $0x21] sm:$0xff]
      %v1236 = vld [vmem:[%s953 + $0x31] sm:$0xff]
      %v1237 = vld [vmem:[%s953 + $0x39] sm:$0xff]
      %v1238 = vld [vmem:[%s953 + $0x49] sm:$0xff]
      %v1239 = vld [vmem:[%s953 + $0x51] sm:$0xff]
      %v1240 = vld [vmem:[%s953 + $0x61] sm:$0xff]
      %v1241 = vld [vmem:[%s953 + $0x69] sm:$0xff]
      %v1242 = vld [vmem:[%s953 + $0x79] sm:$0xff]
      %v1243 = vld [vmem:[%s953 + $0x81] sm:$0xff]
      %v1244 = vld [vmem:[%s953 + $0x91] sm:$0xff]
      %v1245 = vld [vmem:[%s953 + $0x99] sm:$0xff]
      %v1246 = vld [vmem:[%s953 + $0xa9] sm:$0xff]
      %v1247 = vld [vmem:[%s953 + $0xb1] sm:$0xff]
      %v1248 = vld [vmem:[%s953 + $0xc1] sm:$0xff]
      %v1249 = vld [vmem:[%s953 + $0xc9] sm:$0xff]
      %v1250 = vld [vmem:[%s953 + $0xd9] sm:$0xff]
      %v1251 = vld [vmem:[%s953 + $0xe1] sm:$0xff]
      %v1252 = vld [vmem:[%s953 + $0xf1] sm:$0xff]
      %v1253 = vld [vmem:[%s953 + $0xf9] sm:$0xff]
      %v1254 = vld [vmem:[%s953 + $0x109] sm:$0xff]
      %v1255 = vld [vmem:[%s953 + $0x111] sm:$0xff]
      %v1256 = vld [vmem:[%s953 + $0x121] sm:$0xff]
      %v1257 = vld [vmem:[%s953 + $0x129] sm:$0xff]
      %v1258 = vld [vmem:[%s953 + $0x139] sm:$0xff]
      %v1259 = vld [vmem:[%s953 + $0x141] sm:$0xff]
      %v1260 = vld [vmem:[%s953 + $0x151] sm:$0xff]
      %v1261 = vld [vmem:[%s953 + $0x159] sm:$0xff]
      %v1262 = vld [vmem:[%s953 + $0x169] sm:$0xff]
      %v1263 = vld [vmem:[%s953 + $0x171] sm:$0xff]
      %s1264 = scalar_lea.vmem %s1, 16
      %v1265 = vld [vmem:[%s1264] sm:$0xf]
      %v1267 = vsel %vm249, %v1232, 0
      %v1270 = vsel %vm249, %v1233, 0
      %v1273 = vsel %vm249, %v1234, 0
      %v1276 = vsel %vm249, %v1235, 0
      %v1279 = vsel %vm249, %v1236, 0
      %v1282 = vsel %vm249, %v1237, 0
      %v1285 = vsel %vm249, %v1238, 0
      %v1288 = vsel %vm249, %v1239, 0
      %v1291 = vsel %vm249, %v1240, 0
      %v1294 = vsel %vm249, %v1241, 0
      %v1297 = vsel %vm249, %v1242, 0
      %v1300 = vsel %vm249, %v1243, 0
      %v1303 = vsel %vm249, %v1244, 0
      %v1306 = vsel %vm249, %v1245, 0
      %v1309 = vsel %vm249, %v1246, 0
      %v1312 = vsel %vm249, %v1247, 0
      %v1315 = vsel %vm249, %v1248, 0
      %v1318 = vsel %vm249, %v1249, 0
      %v1321 = vsel %vm249, %v1250, 0
      %v1324 = vsel %vm249, %v1251, 0
      %v1327 = vsel %vm249, %v1252, 0
      %v1330 = vsel %vm249, %v1253, 0
      %v1333 = vsel %vm249, %v1254, 0
      %v1336 = vsel %vm249, %v1255, 0
      %v1339 = vsel %vm249, %v1256, 0
      %v1342 = vsel %vm249, %v1257, 0
      %v1345 = vsel %vm249, %v1258, 0
      %v1348 = vsel %vm249, %v1259, 0
      %v1351 = vsel %vm249, %v1260, 0
      %v1354 = vsel %vm249, %v1261, 0
      %v1357 = vsel %vm249, %v1262, 0
      %v1360 = vsel %vm249, %v1263, 0
      %v1363 = vsel %vm346, %v1265, 0
      %1365 = vmatpush.msra.mxu0 0.0
      %1366 = vmatpush.msra.mxu0 0.0
      %1367 = vmatpush.msra.mxu0 0.0
      %1368 = vmatpush.msra.mxu0 0.0
      %1369 = vmatpush.msra.mxu0 0.0
      %1370 = vmatpush.msra.mxu0 0.0
      %1371 = vmatpush.msra.mxu0 0.0
      %1372 = vmatpush.msra.mxu0 0.0
      %1373 = vmatpush.msra.mxu0 0.0
      %1374 = vmatpush.msra.mxu0 0.0
      %1375 = vmatpush.msra.mxu0 0.0
      %1376 = vmatpush.msra.mxu0 0.0
      %1377 = vmatpush.msra.mxu0 0.0
      %1378 = vmatpush.msra.mxu0 0.0
      %1379 = vmatpush.msra.mxu0 0.0
      %1380 = vmatpush.msra.mxu0 %v1363
      %1381 = vmatmul.f32.gmra.mxu0 %v1267
      %v1382 = vpop.f32.mrf.mxu0
      %v1383 = vadd.f32 0.0, %v1382
      %1384 = vmatmul.f32.gmra.mxu0 %v1270
      %v1385 = vpop.f32.mrf.mxu0
      %v1386 = vadd.f32 0.0, %v1385
      %1387 = vmatmul.f32.gmra.mxu0 %v1273
      %v1388 = vpop.f32.mrf.mxu0
      %v1389 = vadd.f32 0.0, %v1388
      %1390 = vmatmul.f32.gmra.mxu0 %v1276
      %v1391 = vpop.f32.mrf.mxu0
      %v1392 = vadd.f32 0.0, %v1391
      %1393 = vmatmul.f32.gmra.mxu0 %v1279
      %v1394 = vpop.f32.mrf.mxu0
      %v1395 = vadd.f32 0.0, %v1394
      %1396 = vmatmul.f32.gmra.mxu0 %v1282
      %v1397 = vpop.f32.mrf.mxu0
      %v1398 = vadd.f32 0.0, %v1397
      %1399 = vmatmul.f32.gmra.mxu0 %v1285
      %v1400 = vpop.f32.mrf.mxu0
      %v1401 = vadd.f32 0.0, %v1400
      %1402 = vmatmul.f32.gmra.mxu0 %v1288
      %v1403 = vpop.f32.mrf.mxu0
      %v1404 = vadd.f32 0.0, %v1403
      %1405 = vmatmul.f32.gmra.mxu0 %v1291
      %v1406 = vpop.f32.mrf.mxu0
      %v1407 = vadd.f32 0.0, %v1406
      %1408 = vmatmul.f32.gmra.mxu0 %v1294
      %v1409 = vpop.f32.mrf.mxu0
      %v1410 = vadd.f32 0.0, %v1409
      %1411 = vmatmul.f32.gmra.mxu0 %v1297
      %v1412 = vpop.f32.mrf.mxu0
      %v1413 = vadd.f32 0.0, %v1412
      %1414 = vmatmul.f32.gmra.mxu0 %v1300
      %v1415 = vpop.f32.mrf.mxu0
      %v1416 = vadd.f32 0.0, %v1415
      %1417 = vmatmul.f32.gmra.mxu0 %v1303
      %v1418 = vpop.f32.mrf.mxu0
      %v1419 = vadd.f32 0.0, %v1418
      %1420 = vmatmul.f32.gmra.mxu0 %v1306
      %v1421 = vpop.f32.mrf.mxu0
      %v1422 = vadd.f32 0.0, %v1421
      %1423 = vmatmul.f32.gmra.mxu0 %v1309
      %v1424 = vpop.f32.mrf.mxu0
      %v1425 = vadd.f32 0.0, %v1424
      %1426 = vmatmul.f32.gmra.mxu0 %v1312
      %v1427 = vpop.f32.mrf.mxu0
      %v1428 = vadd.f32 0.0, %v1427
      %1429 = vmatmul.f32.gmra.mxu0 %v1315
      %v1430 = vpop.f32.mrf.mxu0
      %v1431 = vadd.f32 0.0, %v1430
      %1432 = vmatmul.f32.gmra.mxu0 %v1318
      %v1433 = vpop.f32.mrf.mxu0
      %v1434 = vadd.f32 0.0, %v1433
      %1435 = vmatmul.f32.gmra.mxu0 %v1321
      %v1436 = vpop.f32.mrf.mxu0
      %v1437 = vadd.f32 0.0, %v1436
      %1438 = vmatmul.f32.gmra.mxu0 %v1324
      %v1439 = vpop.f32.mrf.mxu0
      %v1440 = vadd.f32 0.0, %v1439
      %1441 = vmatmul.f32.gmra.mxu0 %v1327
      %v1442 = vpop.f32.mrf.mxu0
      %v1443 = vadd.f32 0.0, %v1442
      %1444 = vmatmul.f32.gmra.mxu0 %v1330
      %v1445 = vpop.f32.mrf.mxu0
      %v1446 = vadd.f32 0.0, %v1445
      %1447 = vmatmul.f32.gmra.mxu0 %v1333
      %v1448 = vpop.f32.mrf.mxu0
      %v1449 = vadd.f32 0.0, %v1448
      %1450 = vmatmul.f32.gmra.mxu0 %v1336
      %v1451 = vpop.f32.mrf.mxu0
      %v1452 = vadd.f32 0.0, %v1451
      %1453 = vmatmul.f32.gmra.mxu0 %v1339
      %v1454 = vpop.f32.mrf.mxu0
      %v1455 = vadd.f32 0.0, %v1454
      %1456 = vmatmul.f32.gmra.mxu0 %v1342
      %v1457 = vpop.f32.mrf.mxu0
      %v1458 = vadd.f32 0.0, %v1457
      %1459 = vmatmul.f32.gmra.mxu0 %v1345
      %v1460 = vpop.f32.mrf.mxu0
      %v1461 = vadd.f32 0.0, %v1460
      %1462 = vmatmul.f32.gmra.mxu0 %v1348
      %v1463 = vpop.f32.mrf.mxu0
      %v1464 = vadd.f32 0.0, %v1463
      %1465 = vmatmul.f32.gmra.mxu0 %v1351
      %v1466 = vpop.f32.mrf.mxu0
      %v1467 = vadd.f32 0.0, %v1466
      %1468 = vmatmul.f32.gmra.mxu0 %v1354
      %v1469 = vpop.f32.mrf.mxu0
      %v1470 = vadd.f32 0.0, %v1469
      %1471 = vmatmul.f32.gmra.mxu0 %v1357
      %v1472 = vpop.f32.mrf.mxu0
      %v1473 = vadd.f32 0.0, %v1472
      %1474 = vmatmul.f32.gmra.mxu0 %v1360
      %v1475 = vpop.f32.mrf.mxu0
      %v1476 = vadd.f32 0.0, %v1475
      %1477 = vdwg.mxu0
      %v1478 = vadd.f32 %v1200, %v1383
      %v1479 = vadd.f32 %v1201, %v1386
      %v1480 = vadd.f32 %v1202, %v1389
      %v1481 = vadd.f32 %v1203, %v1392
      %v1482 = vadd.f32 %v1204, %v1395
      %v1483 = vadd.f32 %v1205, %v1398
      %v1484 = vadd.f32 %v1206, %v1401
      %v1485 = vadd.f32 %v1207, %v1404
      %v1486 = vadd.f32 %v1208, %v1407
      %v1487 = vadd.f32 %v1209, %v1410
      %v1488 = vadd.f32 %v1210, %v1413
      %v1489 = vadd.f32 %v1211, %v1416
      %v1490 = vadd.f32 %v1212, %v1419
      %v1491 = vadd.f32 %v1213, %v1422
      %v1492 = vadd.f32 %v1214, %v1425
      %v1493 = vadd.f32 %v1215, %v1428
      %v1494 = vadd.f32 %v1216, %v1431
      %v1495 = vadd.f32 %v1217, %v1434
      %v1496 = vadd.f32 %v1218, %v1437
      %v1497 = vadd.f32 %v1219, %v1440
      %v1498 = vadd.f32 %v1220, %v1443
      %v1499 = vadd.f32 %v1221, %v1446
      %v1500 = vadd.f32 %v1222, %v1449
      %v1501 = vadd.f32 %v1223, %v1452
      %v1502 = vadd.f32 %v1224, %v1455
      %v1503 = vadd.f32 %v1225, %v1458
      %v1504 = vadd.f32 %v1226, %v1461
      %v1505 = vadd.f32 %v1227, %v1464
      %v1506 = vadd.f32 %v1228, %v1467
      %v1507 = vadd.f32 %v1229, %v1470
      %v1508 = vadd.f32 %v1230, %v1473
      %v1509 = vadd.f32 %v1231, %v1476
      %v1510 = vld [vmem:[%s953 + $0x2] sm:$0xff]
      %v1511 = vld [vmem:[%s953 + $0xa] sm:$0xff]
      %v1512 = vld [vmem:[%s953 + $0x1a] sm:$0xff]
      %v1513 = vld [vmem:[%s953 + $0x22] sm:$0xff]
      %v1514 = vld [vmem:[%s953 + $0x32] sm:$0xff]
      %v1515 = vld [vmem:[%s953 + $0x3a] sm:$0xff]
      %v1516 = vld [vmem:[%s953 + $0x4a] sm:$0xff]
      %v1517 = vld [vmem:[%s953 + $0x52] sm:$0xff]
      %v1518 = vld [vmem:[%s953 + $0x62] sm:$0xff]
      %v1519 = vld [vmem:[%s953 + $0x6a] sm:$0xff]
      %v1520 = vld [vmem:[%s953 + $0x7a] sm:$0xff]
      %v1521 = vld [vmem:[%s953 + $0x82] sm:$0xff]
      %v1522 = vld [vmem:[%s953 + $0x92] sm:$0xff]
      %v1523 = vld [vmem:[%s953 + $0x9a] sm:$0xff]
      %v1524 = vld [vmem:[%s953 + $0xaa] sm:$0xff]
      %v1525 = vld [vmem:[%s953 + $0xb2] sm:$0xff]
      %v1526 = vld [vmem:[%s953 + $0xc2] sm:$0xff]
      %v1527 = vld [vmem:[%s953 + $0xca] sm:$0xff]
      %v1528 = vld [vmem:[%s953 + $0xda] sm:$0xff]
      %v1529 = vld [vmem:[%s953 + $0xe2] sm:$0xff]
      %v1530 = vld [vmem:[%s953 + $0xf2] sm:$0xff]
      %v1531 = vld [vmem:[%s953 + $0xfa] sm:$0xff]
      %v1532 = vld [vmem:[%s953 + $0x10a] sm:$0xff]
      %v1533 = vld [vmem:[%s953 + $0x112] sm:$0xff]
      %v1534 = vld [vmem:[%s953 + $0x122] sm:$0xff]
      %v1535 = vld [vmem:[%s953 + $0x12a] sm:$0xff]
      %v1536 = vld [vmem:[%s953 + $0x13a] sm:$0xff]
      %v1537 = vld [vmem:[%s953 + $0x142] sm:$0xff]
      %v1538 = vld [vmem:[%s953 + $0x152] sm:$0xff]
      %v1539 = vld [vmem:[%s953 + $0x15a] sm:$0xff]
      %v1540 = vld [vmem:[%s953 + $0x16a] sm:$0xff]
      %v1541 = vld [vmem:[%s953 + $0x172] sm:$0xff]
      %s1542 = scalar_lea.vmem %s1, 20
      %v1543 = vld [vmem:[%s1542] sm:$0xf]
      %v1545 = vsel %vm249, %v1510, 0
      %v1548 = vsel %vm249, %v1511, 0
      %v1551 = vsel %vm249, %v1512, 0
      %v1554 = vsel %vm249, %v1513, 0
      %v1557 = vsel %vm249, %v1514, 0
      %v1560 = vsel %vm249, %v1515, 0
      %v1563 = vsel %vm249, %v1516, 0
      %v1566 = vsel %vm249, %v1517, 0
      %v1569 = vsel %vm249, %v1518, 0
      %v1572 = vsel %vm249, %v1519, 0
      %v1575 = vsel %vm249, %v1520, 0
      %v1578 = vsel %vm249, %v1521, 0
      %v1581 = vsel %vm249, %v1522, 0
      %v1584 = vsel %vm249, %v1523, 0
      %v1587 = vsel %vm249, %v1524, 0
      %v1590 = vsel %vm249, %v1525, 0
      %v1593 = vsel %vm249, %v1526, 0
      %v1596 = vsel %vm249, %v1527, 0
      %v1599 = vsel %vm249, %v1528, 0
      %v1602 = vsel %vm249, %v1529, 0
      %v1605 = vsel %vm249, %v1530, 0
      %v1608 = vsel %vm249, %v1531, 0
      %v1611 = vsel %vm249, %v1532, 0
      %v1614 = vsel %vm249, %v1533, 0
      %v1617 = vsel %vm249, %v1534, 0
      %v1620 = vsel %vm249, %v1535, 0
      %v1623 = vsel %vm249, %v1536, 0
      %v1626 = vsel %vm249, %v1537, 0
      %v1629 = vsel %vm249, %v1538, 0
      %v1632 = vsel %vm249, %v1539, 0
      %v1635 = vsel %vm249, %v1540, 0
      %v1638 = vsel %vm249, %v1541, 0
      %v1641 = vsel %vm346, %v1543, 0
      %1643 = vmatpush.msra.mxu0 0.0
      %1644 = vmatpush.msra.mxu0 0.0
      %1645 = vmatpush.msra.mxu0 0.0
      %1646 = vmatpush.msra.mxu0 0.0
      %1647 = vmatpush.msra.mxu0 0.0
      %1648 = vmatpush.msra.mxu0 0.0
      %1649 = vmatpush.msra.mxu0 0.0
      %1650 = vmatpush.msra.mxu0 0.0
      %1651 = vmatpush.msra.mxu0 0.0
      %1652 = vmatpush.msra.mxu0 0.0
      %1653 = vmatpush.msra.mxu0 0.0
      %1654 = vmatpush.msra.mxu0 0.0
      %1655 = vmatpush.msra.mxu0 0.0
      %1656 = vmatpush.msra.mxu0 0.0
      %1657 = vmatpush.msra.mxu0 0.0
      %1658 = vmatpush.msra.mxu0 %v1641
      %1659 = vmatmul.f32.gmra.mxu0 %v1545
      %v1660 = vpop.f32.mrf.mxu0
      %v1661 = vadd.f32 0.0, %v1660
      %1662 = vmatmul.f32.gmra.mxu0 %v1548
      %v1663 = vpop.f32.mrf.mxu0
      %v1664 = vadd.f32 0.0, %v1663
      %1665 = vmatmul.f32.gmra.mxu0 %v1551
      %v1666 = vpop.f32.mrf.mxu0
      %v1667 = vadd.f32 0.0, %v1666
      %1668 = vmatmul.f32.gmra.mxu0 %v1554
      %v1669 = vpop.f32.mrf.mxu0
      %v1670 = vadd.f32 0.0, %v1669
      %1671 = vmatmul.f32.gmra.mxu0 %v1557
      %v1672 = vpop.f32.mrf.mxu0
      %v1673 = vadd.f32 0.0, %v1672
      %1674 = vmatmul.f32.gmra.mxu0 %v1560
      %v1675 = vpop.f32.mrf.mxu0
      %v1676 = vadd.f32 0.0, %v1675
      %1677 = vmatmul.f32.gmra.mxu0 %v1563
      %v1678 = vpop.f32.mrf.mxu0
      %v1679 = vadd.f32 0.0, %v1678
      %1680 = vmatmul.f32.gmra.mxu0 %v1566
      %v1681 = vpop.f32.mrf.mxu0
      %v1682 = vadd.f32 0.0, %v1681
      %1683 = vmatmul.f32.gmra.mxu0 %v1569
      %v1684 = vpop.f32.mrf.mxu0
      %v1685 = vadd.f32 0.0, %v1684
      %1686 = vmatmul.f32.gmra.mxu0 %v1572
      %v1687 = vpop.f32.mrf.mxu0
      %v1688 = vadd.f32 0.0, %v1687
      %1689 = vmatmul.f32.gmra.mxu0 %v1575
      %v1690 = vpop.f32.mrf.mxu0
      %v1691 = vadd.f32 0.0, %v1690
      %1692 = vmatmul.f32.gmra.mxu0 %v1578
      %v1693 = vpop.f32.mrf.mxu0
      %v1694 = vadd.f32 0.0, %v1693
      %1695 = vmatmul.f32.gmra.mxu0 %v1581
      %v1696 = vpop.f32.mrf.mxu0
      %v1697 = vadd.f32 0.0, %v1696
      %1698 = vmatmul.f32.gmra.mxu0 %v1584
      %v1699 = vpop.f32.mrf.mxu0
      %v1700 = vadd.f32 0.0, %v1699
      %1701 = vmatmul.f32.gmra.mxu0 %v1587
      %v1702 = vpop.f32.mrf.mxu0
      %v1703 = vadd.f32 0.0, %v1702
      %1704 = vmatmul.f32.gmra.mxu0 %v1590
      %v1705 = vpop.f32.mrf.mxu0
      %v1706 = vadd.f32 0.0, %v1705
      %1707 = vmatmul.f32.gmra.mxu0 %v1593
      %v1708 = vpop.f32.mrf.mxu0
      %v1709 = vadd.f32 0.0, %v1708
      %1710 = vmatmul.f32.gmra.mxu0 %v1596
      %v1711 = vpop.f32.mrf.mxu0
      %v1712 = vadd.f32 0.0, %v1711
      %1713 = vmatmul.f32.gmra.mxu0 %v1599
      %v1714 = vpop.f32.mrf.mxu0
      %v1715 = vadd.f32 0.0, %v1714
      %1716 = vmatmul.f32.gmra.mxu0 %v1602
      %v1717 = vpop.f32.mrf.mxu0
      %v1718 = vadd.f32 0.0, %v1717
      %1719 = vmatmul.f32.gmra.mxu0 %v1605
      %v1720 = vpop.f32.mrf.mxu0
      %v1721 = vadd.f32 0.0, %v1720
      %1722 = vmatmul.f32.gmra.mxu0 %v1608
      %v1723 = vpop.f32.mrf.mxu0
      %v1724 = vadd.f32 0.0, %v1723
      %1725 = vmatmul.f32.gmra.mxu0 %v1611
      %v1726 = vpop.f32.mrf.mxu0
      %v1727 = vadd.f32 0.0, %v1726
      %1728 = vmatmul.f32.gmra.mxu0 %v1614
      %v1729 = vpop.f32.mrf.mxu0
      %v1730 = vadd.f32 0.0, %v1729
      %1731 = vmatmul.f32.gmra.mxu0 %v1617
      %v1732 = vpop.f32.mrf.mxu0
      %v1733 = vadd.f32 0.0, %v1732
      %1734 = vmatmul.f32.gmra.mxu0 %v1620
      %v1735 = vpop.f32.mrf.mxu0
      %v1736 = vadd.f32 0.0, %v1735
      %1737 = vmatmul.f32.gmra.mxu0 %v1623
      %v1738 = vpop.f32.mrf.mxu0
      %v1739 = vadd.f32 0.0, %v1738
      %1740 = vmatmul.f32.gmra.mxu0 %v1626
      %v1741 = vpop.f32.mrf.mxu0
      %v1742 = vadd.f32 0.0, %v1741
      %1743 = vmatmul.f32.gmra.mxu0 %v1629
      %v1744 = vpop.f32.mrf.mxu0
      %v1745 = vadd.f32 0.0, %v1744
      %1746 = vmatmul.f32.gmra.mxu0 %v1632
      %v1747 = vpop.f32.mrf.mxu0
      %v1748 = vadd.f32 0.0, %v1747
      %1749 = vmatmul.f32.gmra.mxu0 %v1635
      %v1750 = vpop.f32.mrf.mxu0
      %v1751 = vadd.f32 0.0, %v1750
      %1752 = vmatmul.f32.gmra.mxu0 %v1638
      %v1753 = vpop.f32.mrf.mxu0
      %v1754 = vadd.f32 0.0, %v1753
      %1755 = vdwg.mxu0
      %v1756 = vadd.f32 %v1478, %v1661
      %v1757 = vadd.f32 %v1479, %v1664
      %v1758 = vadd.f32 %v1480, %v1667
      %v1759 = vadd.f32 %v1481, %v1670
      %v1760 = vadd.f32 %v1482, %v1673
      %v1761 = vadd.f32 %v1483, %v1676
      %v1762 = vadd.f32 %v1484, %v1679
      %v1763 = vadd.f32 %v1485, %v1682
      %v1764 = vadd.f32 %v1486, %v1685
      %v1765 = vadd.f32 %v1487, %v1688
      %v1766 = vadd.f32 %v1488, %v1691
      %v1767 = vadd.f32 %v1489, %v1694
      %v1768 = vadd.f32 %v1490, %v1697
      %v1769 = vadd.f32 %v1491, %v1700
      %v1770 = vadd.f32 %v1492, %v1703
      %v1771 = vadd.f32 %v1493, %v1706
      %v1772 = vadd.f32 %v1494, %v1709
      %v1773 = vadd.f32 %v1495, %v1712
      %v1774 = vadd.f32 %v1496, %v1715
      %v1775 = vadd.f32 %v1497, %v1718
      %v1776 = vadd.f32 %v1498, %v1721
      %v1777 = vadd.f32 %v1499, %v1724
      %v1778 = vadd.f32 %v1500, %v1727
      %v1779 = vadd.f32 %v1501, %v1730
      %v1780 = vadd.f32 %v1502, %v1733
      %v1781 = vadd.f32 %v1503, %v1736
      %v1782 = vadd.f32 %v1504, %v1739
      %v1783 = vadd.f32 %v1505, %v1742
      %v1784 = vadd.f32 %v1506, %v1745
      %v1785 = vadd.f32 %v1507, %v1748
      %v1786 = vadd.f32 %v1508, %v1751
      %v1787 = vadd.f32 %v1509, %v1754
      %s1788 = scalar_lea.vmem %s172, 48
      %v1789 = vld [vmem:[%s1788] sm:$0xff]
      %v1790 = vld [vmem:[%s1788 + $0x8] sm:$0xff]
      %v1791 = vld [vmem:[%s1788 + $0x18] sm:$0xff]
      %v1792 = vld [vmem:[%s1788 + $0x20] sm:$0xff]
      %v1793 = vld [vmem:[%s1788 + $0x30] sm:$0xff]
      %v1794 = vld [vmem:[%s1788 + $0x38] sm:$0xff]
      %v1795 = vld [vmem:[%s1788 + $0x48] sm:$0xff]
      %v1796 = vld [vmem:[%s1788 + $0x50] sm:$0xff]
      %v1797 = vld [vmem:[%s1788 + $0x60] sm:$0xff]
      %v1798 = vld [vmem:[%s1788 + $0x68] sm:$0xff]
      %v1799 = vld [vmem:[%s1788 + $0x78] sm:$0xff]
      %v1800 = vld [vmem:[%s1788 + $0x80] sm:$0xff]
      %v1801 = vld [vmem:[%s1788 + $0x90] sm:$0xff]
      %v1802 = vld [vmem:[%s1788 + $0x98] sm:$0xff]
      %v1803 = vld [vmem:[%s1788 + $0xa8] sm:$0xff]
      %v1804 = vld [vmem:[%s1788 + $0xb0] sm:$0xff]
      %v1805 = vld [vmem:[%s1788 + $0xc0] sm:$0xff]
      %v1806 = vld [vmem:[%s1788 + $0xc8] sm:$0xff]
      %v1807 = vld [vmem:[%s1788 + $0xd8] sm:$0xff]
      %v1808 = vld [vmem:[%s1788 + $0xe0] sm:$0xff]
      %v1809 = vld [vmem:[%s1788 + $0xf0] sm:$0xff]
      %v1810 = vld [vmem:[%s1788 + $0xf8] sm:$0xff]
      %v1811 = vld [vmem:[%s1788 + $0x108] sm:$0xff]
      %v1812 = vld [vmem:[%s1788 + $0x110] sm:$0xff]
      %v1813 = vld [vmem:[%s1788 + $0x120] sm:$0xff]
      %v1814 = vld [vmem:[%s1788 + $0x128] sm:$0xff]
      %v1815 = vld [vmem:[%s1788 + $0x138] sm:$0xff]
      %v1816 = vld [vmem:[%s1788 + $0x140] sm:$0xff]
      %v1817 = vld [vmem:[%s1788 + $0x150] sm:$0xff]
      %v1818 = vld [vmem:[%s1788 + $0x158] sm:$0xff]
      %v1819 = vld [vmem:[%s1788 + $0x168] sm:$0xff]
      %v1820 = vld [vmem:[%s1788 + $0x170] sm:$0xff]
      %s1821 = scalar_lea.vmem %s1, 24
      %v1822 = vld [vmem:[%s1821] sm:$0xf]
      %v1824 = vsel %vm249, %v1789, 0
      %v1827 = vsel %vm249, %v1790, 0
      %v1830 = vsel %vm249, %v1791, 0
      %v1833 = vsel %vm249, %v1792, 0
      %v1836 = vsel %vm249, %v1793, 0
      %v1839 = vsel %vm249, %v1794, 0
      %v1842 = vsel %vm249, %v1795, 0
      %v1845 = vsel %vm249, %v1796, 0
      %v1848 = vsel %vm249, %v1797, 0
      %v1851 = vsel %vm249, %v1798, 0
      %v1854 = vsel %vm249, %v1799, 0
      %v1857 = vsel %vm249, %v1800, 0
      %v1860 = vsel %vm249, %v1801, 0
      %v1863 = vsel %vm249, %v1802, 0
      %v1866 = vsel %vm249, %v1803, 0
      %v1869 = vsel %vm249, %v1804, 0
      %v1872 = vsel %vm249, %v1805, 0
      %v1875 = vsel %vm249, %v1806, 0
      %v1878 = vsel %vm249, %v1807, 0
      %v1881 = vsel %vm249, %v1808, 0
      %v1884 = vsel %vm249, %v1809, 0
      %v1887 = vsel %vm249, %v1810, 0
      %v1890 = vsel %vm249, %v1811, 0
      %v1893 = vsel %vm249, %v1812, 0
      %v1896 = vsel %vm249, %v1813, 0
      %v1899 = vsel %vm249, %v1814, 0
      %v1902 = vsel %vm249, %v1815, 0
      %v1905 = vsel %vm249, %v1816, 0
      %v1908 = vsel %vm249, %v1817, 0
      %v1911 = vsel %vm249, %v1818, 0
      %v1914 = vsel %vm249, %v1819, 0
      %v1917 = vsel %vm249, %v1820, 0
      %v1920 = vsel %vm346, %v1822, 0
      %1922 = vmatpush.msra.mxu0 0.0
      %1923 = vmatpush.msra.mxu0 0.0
      %1924 = vmatpush.msra.mxu0 0.0
      %1925 = vmatpush.msra.mxu0 0.0
      %1926 = vmatpush.msra.mxu0 0.0
      %1927 = vmatpush.msra.mxu0 0.0
      %1928 = vmatpush.msra.mxu0 0.0
      %1929 = vmatpush.msra.mxu0 0.0
      %1930 = vmatpush.msra.mxu0 0.0
      %1931 = vmatpush.msra.mxu0 0.0
      %1932 = vmatpush.msra.mxu0 0.0
      %1933 = vmatpush.msra.mxu0 0.0
      %1934 = vmatpush.msra.mxu0 0.0
      %1935 = vmatpush.msra.mxu0 0.0
      %1936 = vmatpush.msra.mxu0 0.0
      %1937 = vmatpush.msra.mxu0 %v1920
      %1938 = vmatmul.f32.gmra.mxu0 %v1824
      %v1939 = vpop.f32.mrf.mxu0
      %v1940 = vadd.f32 0.0, %v1939
      %1941 = vmatmul.f32.gmra.mxu0 %v1827
      %v1942 = vpop.f32.mrf.mxu0
      %v1943 = vadd.f32 0.0, %v1942
      %1944 = vmatmul.f32.gmra.mxu0 %v1830
      %v1945 = vpop.f32.mrf.mxu0
      %v1946 = vadd.f32 0.0, %v1945
      %1947 = vmatmul.f32.gmra.mxu0 %v1833
      %v1948 = vpop.f32.mrf.mxu0
      %v1949 = vadd.f32 0.0, %v1948
      %1950 = vmatmul.f32.gmra.mxu0 %v1836
      %v1951 = vpop.f32.mrf.mxu0
      %v1952 = vadd.f32 0.0, %v1951
      %1953 = vmatmul.f32.gmra.mxu0 %v1839
      %v1954 = vpop.f32.mrf.mxu0
      %v1955 = vadd.f32 0.0, %v1954
      %1956 = vmatmul.f32.gmra.mxu0 %v1842
      %v1957 = vpop.f32.mrf.mxu0
      %v1958 = vadd.f32 0.0, %v1957
      %1959 = vmatmul.f32.gmra.mxu0 %v1845
      %v1960 = vpop.f32.mrf.mxu0
      %v1961 = vadd.f32 0.0, %v1960
      %1962 = vmatmul.f32.gmra.mxu0 %v1848
      %v1963 = vpop.f32.mrf.mxu0
      %v1964 = vadd.f32 0.0, %v1963
      %1965 = vmatmul.f32.gmra.mxu0 %v1851
      %v1966 = vpop.f32.mrf.mxu0
      %v1967 = vadd.f32 0.0, %v1966
      %1968 = vmatmul.f32.gmra.mxu0 %v1854
      %v1969 = vpop.f32.mrf.mxu0
      %v1970 = vadd.f32 0.0, %v1969
      %1971 = vmatmul.f32.gmra.mxu0 %v1857
      %v1972 = vpop.f32.mrf.mxu0
      %v1973 = vadd.f32 0.0, %v1972
      %1974 = vmatmul.f32.gmra.mxu0 %v1860
      %v1975 = vpop.f32.mrf.mxu0
      %v1976 = vadd.f32 0.0, %v1975
      %1977 = vmatmul.f32.gmra.mxu0 %v1863
      %v1978 = vpop.f32.mrf.mxu0
      %v1979 = vadd.f32 0.0, %v1978
      %1980 = vmatmul.f32.gmra.mxu0 %v1866
      %v1981 = vpop.f32.mrf.mxu0
      %v1982 = vadd.f32 0.0, %v1981
      %1983 = vmatmul.f32.gmra.mxu0 %v1869
      %v1984 = vpop.f32.mrf.mxu0
      %v1985 = vadd.f32 0.0, %v1984
      %1986 = vmatmul.f32.gmra.mxu0 %v1872
      %v1987 = vpop.f32.mrf.mxu0
      %v1988 = vadd.f32 0.0, %v1987
      %1989 = vmatmul.f32.gmra.mxu0 %v1875
      %v1990 = vpop.f32.mrf.mxu0
      %v1991 = vadd.f32 0.0, %v1990
      %1992 = vmatmul.f32.gmra.mxu0 %v1878
      %v1993 = vpop.f32.mrf.mxu0
      %v1994 = vadd.f32 0.0, %v1993
      %1995 = vmatmul.f32.gmra.mxu0 %v1881
      %v1996 = vpop.f32.mrf.mxu0
      %v1997 = vadd.f32 0.0, %v1996
      %1998 = vmatmul.f32.gmra.mxu0 %v1884
      %v1999 = vpop.f32.mrf.mxu0
      %v2000 = vadd.f32 0.0, %v1999
      %2001 = vmatmul.f32.gmra.mxu0 %v1887
      %v2002 = vpop.f32.mrf.mxu0
      %v2003 = vadd.f32 0.0, %v2002
      %2004 = vmatmul.f32.gmra.mxu0 %v1890
      %v2005 = vpop.f32.mrf.mxu0
      %v2006 = vadd.f32 0.0, %v2005
      %2007 = vmatmul.f32.gmra.mxu0 %v1893
      %v2008 = vpop.f32.mrf.mxu0
      %v2009 = vadd.f32 0.0, %v2008
      %2010 = vmatmul.f32.gmra.mxu0 %v1896
      %v2011 = vpop.f32.mrf.mxu0
      %v2012 = vadd.f32 0.0, %v2011
      %2013 = vmatmul.f32.gmra.mxu0 %v1899
      %v2014 = vpop.f32.mrf.mxu0
      %v2015 = vadd.f32 0.0, %v2014
      %2016 = vmatmul.f32.gmra.mxu0 %v1902
      %v2017 = vpop.f32.mrf.mxu0
      %v2018 = vadd.f32 0.0, %v2017
      %2019 = vmatmul.f32.gmra.mxu0 %v1905
      %v2020 = vpop.f32.mrf.mxu0
      %v2021 = vadd.f32 0.0, %v2020
      %2022 = vmatmul.f32.gmra.mxu0 %v1908
      %v2023 = vpop.f32.mrf.mxu0
      %v2024 = vadd.f32 0.0, %v2023
      %2025 = vmatmul.f32.gmra.mxu0 %v1911
      %v2026 = vpop.f32.mrf.mxu0
      %v2027 = vadd.f32 0.0, %v2026
      %2028 = vmatmul.f32.gmra.mxu0 %v1914
      %v2029 = vpop.f32.mrf.mxu0
      %v2030 = vadd.f32 0.0, %v2029
      %2031 = vmatmul.f32.gmra.mxu0 %v1917
      %v2032 = vpop.f32.mrf.mxu0
      %v2033 = vadd.f32 0.0, %v2032
      %2034 = vdwg.mxu0
      %v2035 = vadd.f32 %v1756, %v1940
      %v2036 = vadd.f32 %v1757, %v1943
      %v2037 = vadd.f32 %v1758, %v1946
      %v2038 = vadd.f32 %v1759, %v1949
      %v2039 = vadd.f32 %v1760, %v1952
      %v2040 = vadd.f32 %v1761, %v1955
      %v2041 = vadd.f32 %v1762, %v1958
      %v2042 = vadd.f32 %v1763, %v1961
      %v2043 = vadd.f32 %v1764, %v1964
      %v2044 = vadd.f32 %v1765, %v1967
      %v2045 = vadd.f32 %v1766, %v1970
      %v2046 = vadd.f32 %v1767, %v1973
      %v2047 = vadd.f32 %v1768, %v1976
      %v2048 = vadd.f32 %v1769, %v1979
      %v2049 = vadd.f32 %v1770, %v1982
      %v2050 = vadd.f32 %v1771, %v1985
      %v2051 = vadd.f32 %v1772, %v1988
      %v2052 = vadd.f32 %v1773, %v1991
      %v2053 = vadd.f32 %v1774, %v1994
      %v2054 = vadd.f32 %v1775, %v1997
      %v2055 = vadd.f32 %v1776, %v2000
      %v2056 = vadd.f32 %v1777, %v2003
      %v2057 = vadd.f32 %v1778, %v2006
      %v2058 = vadd.f32 %v1779, %v2009
      %v2059 = vadd.f32 %v1780, %v2012
      %v2060 = vadd.f32 %v1781, %v2015
      %v2061 = vadd.f32 %v1782, %v2018
      %v2062 = vadd.f32 %v1783, %v2021
      %v2063 = vadd.f32 %v1784, %v2024
      %v2064 = vadd.f32 %v1785, %v2027
      %v2065 = vadd.f32 %v1786, %v2030
      %v2066 = vadd.f32 %v1787, %v2033
      %v2067 = vld [vmem:[%s1788 + $0x1] sm:$0xff]
      %v2068 = vld [vmem:[%s1788 + $0x9] sm:$0xff]
      %v2069 = vld [vmem:[%s1788 + $0x19] sm:$0xff]
      %v2070 = vld [vmem:[%s1788 + $0x21] sm:$0xff]
      %v2071 = vld [vmem:[%s1788 + $0x31] sm:$0xff]
      %v2072 = vld [vmem:[%s1788 + $0x39] sm:$0xff]
      %v2073 = vld [vmem:[%s1788 + $0x49] sm:$0xff]
      %v2074 = vld [vmem:[%s1788 + $0x51] sm:$0xff]
      %v2075 = vld [vmem:[%s1788 + $0x61] sm:$0xff]
      %v2076 = vld [vmem:[%s1788 + $0x69] sm:$0xff]
      %v2077 = vld [vmem:[%s1788 + $0x79] sm:$0xff]
      %v2078 = vld [vmem:[%s1788 + $0x81] sm:$0xff]
      %v2079 = vld [vmem:[%s1788 + $0x91] sm:$0xff]
      %v2080 = vld [vmem:[%s1788 + $0x99] sm:$0xff]
      %v2081 = vld [vmem:[%s1788 + $0xa9] sm:$0xff]
      %v2082 = vld [vmem:[%s1788 + $0xb1] sm:$0xff]
      %v2083 = vld [vmem:[%s1788 + $0xc1] sm:$0xff]
      %v2084 = vld [vmem:[%s1788 + $0xc9] sm:$0xff]
      %v2085 = vld [vmem:[%s1788 + $0xd9] sm:$0xff]
      %v2086 = vld [vmem:[%s1788 + $0xe1] sm:$0xff]
      %v2087 = vld [vmem:[%s1788 + $0xf1] sm:$0xff]
      %v2088 = vld [vmem:[%s1788 + $0xf9] sm:$0xff]
      %v2089 = vld [vmem:[%s1788 + $0x109] sm:$0xff]
      %v2090 = vld [vmem:[%s1788 + $0x111] sm:$0xff]
      %v2091 = vld [vmem:[%s1788 + $0x121] sm:$0xff]
      %v2092 = vld [vmem:[%s1788 + $0x129] sm:$0xff]
      %v2093 = vld [vmem:[%s1788 + $0x139] sm:$0xff]
      %v2094 = vld [vmem:[%s1788 + $0x141] sm:$0xff]
      %v2095 = vld [vmem:[%s1788 + $0x151] sm:$0xff]
      %v2096 = vld [vmem:[%s1788 + $0x159] sm:$0xff]
      %v2097 = vld [vmem:[%s1788 + $0x169] sm:$0xff]
      %v2098 = vld [vmem:[%s1788 + $0x171] sm:$0xff]
      %s2099 = scalar_lea.vmem %s1, 28
      %v2100 = vld [vmem:[%s2099] sm:$0xf]
      %v2102 = vsel %vm249, %v2067, 0
      %v2105 = vsel %vm249, %v2068, 0
      %v2108 = vsel %vm249, %v2069, 0
      %v2111 = vsel %vm249, %v2070, 0
      %v2114 = vsel %vm249, %v2071, 0
      %v2117 = vsel %vm249, %v2072, 0
      %v2120 = vsel %vm249, %v2073, 0
      %v2123 = vsel %vm249, %v2074, 0
      %v2126 = vsel %vm249, %v2075, 0
      %v2129 = vsel %vm249, %v2076, 0
      %v2132 = vsel %vm249, %v2077, 0
      %v2135 = vsel %vm249, %v2078, 0
      %v2138 = vsel %vm249, %v2079, 0
      %v2141 = vsel %vm249, %v2080, 0
      %v2144 = vsel %vm249, %v2081, 0
      %v2147 = vsel %vm249, %v2082, 0
      %v2150 = vsel %vm249, %v2083, 0
      %v2153 = vsel %vm249, %v2084, 0
      %v2156 = vsel %vm249, %v2085, 0
      %v2159 = vsel %vm249, %v2086, 0
      %v2162 = vsel %vm249, %v2087, 0
      %v2165 = vsel %vm249, %v2088, 0
      %v2168 = vsel %vm249, %v2089, 0
      %v2171 = vsel %vm249, %v2090, 0
      %v2174 = vsel %vm249, %v2091, 0
      %v2177 = vsel %vm249, %v2092, 0
      %v2180 = vsel %vm249, %v2093, 0
      %v2183 = vsel %vm249, %v2094, 0
      %v2186 = vsel %vm249, %v2095, 0
      %v2189 = vsel %vm249, %v2096, 0
      %v2192 = vsel %vm249, %v2097, 0
      %v2195 = vsel %vm249, %v2098, 0
      %v2198 = vsel %vm346, %v2100, 0
      %2200 = vmatpush.msra.mxu0 0.0
      %2201 = vmatpush.msra.mxu0 0.0
      %2202 = vmatpush.msra.mxu0 0.0
      %2203 = vmatpush.msra.mxu0 0.0
      %2204 = vmatpush.msra.mxu0 0.0
      %2205 = vmatpush.msra.mxu0 0.0
      %2206 = vmatpush.msra.mxu0 0.0
      %2207 = vmatpush.msra.mxu0 0.0
      %2208 = vmatpush.msra.mxu0 0.0
      %2209 = vmatpush.msra.mxu0 0.0
      %2210 = vmatpush.msra.mxu0 0.0
      %2211 = vmatpush.msra.mxu0 0.0
      %2212 = vmatpush.msra.mxu0 0.0
      %2213 = vmatpush.msra.mxu0 0.0
      %2214 = vmatpush.msra.mxu0 0.0
      %2215 = vmatpush.msra.mxu0 %v2198
      %2216 = vmatmul.f32.gmra.mxu0 %v2102
      %v2217 = vpop.f32.mrf.mxu0
      %v2218 = vadd.f32 0.0, %v2217
      %2219 = vmatmul.f32.gmra.mxu0 %v2105
      %v2220 = vpop.f32.mrf.mxu0
      %v2221 = vadd.f32 0.0, %v2220
      %2222 = vmatmul.f32.gmra.mxu0 %v2108
      %v2223 = vpop.f32.mrf.mxu0
      %v2224 = vadd.f32 0.0, %v2223
      %2225 = vmatmul.f32.gmra.mxu0 %v2111
      %v2226 = vpop.f32.mrf.mxu0
      %v2227 = vadd.f32 0.0, %v2226
      %2228 = vmatmul.f32.gmra.mxu0 %v2114
      %v2229 = vpop.f32.mrf.mxu0
      %v2230 = vadd.f32 0.0, %v2229
      %2231 = vmatmul.f32.gmra.mxu0 %v2117
      %v2232 = vpop.f32.mrf.mxu0
      %v2233 = vadd.f32 0.0, %v2232
      %2234 = vmatmul.f32.gmra.mxu0 %v2120
      %v2235 = vpop.f32.mrf.mxu0
      %v2236 = vadd.f32 0.0, %v2235
      %2237 = vmatmul.f32.gmra.mxu0 %v2123
      %v2238 = vpop.f32.mrf.mxu0
      %v2239 = vadd.f32 0.0, %v2238
      %2240 = vmatmul.f32.gmra.mxu0 %v2126
      %v2241 = vpop.f32.mrf.mxu0
      %v2242 = vadd.f32 0.0, %v2241
      %2243 = vmatmul.f32.gmra.mxu0 %v2129
      %v2244 = vpop.f32.mrf.mxu0
      %v2245 = vadd.f32 0.0, %v2244
      %2246 = vmatmul.f32.gmra.mxu0 %v2132
      %v2247 = vpop.f32.mrf.mxu0
      %v2248 = vadd.f32 0.0, %v2247
      %2249 = vmatmul.f32.gmra.mxu0 %v2135
      %v2250 = vpop.f32.mrf.mxu0
      %v2251 = vadd.f32 0.0, %v2250
      %2252 = vmatmul.f32.gmra.mxu0 %v2138
      %v2253 = vpop.f32.mrf.mxu0
      %v2254 = vadd.f32 0.0, %v2253
      %2255 = vmatmul.f32.gmra.mxu0 %v2141
      %v2256 = vpop.f32.mrf.mxu0
      %v2257 = vadd.f32 0.0, %v2256
      %2258 = vmatmul.f32.gmra.mxu0 %v2144
      %v2259 = vpop.f32.mrf.mxu0
      %v2260 = vadd.f32 0.0, %v2259
      %2261 = vmatmul.f32.gmra.mxu0 %v2147
      %v2262 = vpop.f32.mrf.mxu0
      %v2263 = vadd.f32 0.0, %v2262
      %2264 = vmatmul.f32.gmra.mxu0 %v2150
      %v2265 = vpop.f32.mrf.mxu0
      %v2266 = vadd.f32 0.0, %v2265
      %2267 = vmatmul.f32.gmra.mxu0 %v2153
      %v2268 = vpop.f32.mrf.mxu0
      %v2269 = vadd.f32 0.0, %v2268
      %2270 = vmatmul.f32.gmra.mxu0 %v2156
      %v2271 = vpop.f32.mrf.mxu0
      %v2272 = vadd.f32 0.0, %v2271
      %2273 = vmatmul.f32.gmra.mxu0 %v2159
      %v2274 = vpop.f32.mrf.mxu0
      %v2275 = vadd.f32 0.0, %v2274
      %2276 = vmatmul.f32.gmra.mxu0 %v2162
      %v2277 = vpop.f32.mrf.mxu0
      %v2278 = vadd.f32 0.0, %v2277
      %2279 = vmatmul.f32.gmra.mxu0 %v2165
      %v2280 = vpop.f32.mrf.mxu0
      %v2281 = vadd.f32 0.0, %v2280
      %2282 = vmatmul.f32.gmra.mxu0 %v2168
      %v2283 = vpop.f32.mrf.mxu0
      %v2284 = vadd.f32 0.0, %v2283
      %2285 = vmatmul.f32.gmra.mxu0 %v2171
      %v2286 = vpop.f32.mrf.mxu0
      %v2287 = vadd.f32 0.0, %v2286
      %2288 = vmatmul.f32.gmra.mxu0 %v2174
      %v2289 = vpop.f32.mrf.mxu0
      %v2290 = vadd.f32 0.0, %v2289
      %2291 = vmatmul.f32.gmra.mxu0 %v2177
      %v2292 = vpop.f32.mrf.mxu0
      %v2293 = vadd.f32 0.0, %v2292
      %2294 = vmatmul.f32.gmra.mxu0 %v2180
      %v2295 = vpop.f32.mrf.mxu0
      %v2296 = vadd.f32 0.0, %v2295
      %2297 = vmatmul.f32.gmra.mxu0 %v2183
      %v2298 = vpop.f32.mrf.mxu0
      %v2299 = vadd.f32 0.0, %v2298
      %2300 = vmatmul.f32.gmra.mxu0 %v2186
      %v2301 = vpop.f32.mrf.mxu0
      %v2302 = vadd.f32 0.0, %v2301
      %2303 = vmatmul.f32.gmra.mxu0 %v2189
      %v2304 = vpop.f32.mrf.mxu0
      %v2305 = vadd.f32 0.0, %v2304
      %2306 = vmatmul.f32.gmra.mxu0 %v2192
      %v2307 = vpop.f32.mrf.mxu0
      %v2308 = vadd.f32 0.0, %v2307
      %2309 = vmatmul.f32.gmra.mxu0 %v2195
      %v2310 = vpop.f32.mrf.mxu0
      %v2311 = vadd.f32 0.0, %v2310
      %2312 = vdwg.mxu0
      %v2313 = vadd.f32 %v2035, %v2218
      %v2314 = vadd.f32 %v2036, %v2221
      %v2315 = vadd.f32 %v2037, %v2224
      %v2316 = vadd.f32 %v2038, %v2227
      %v2317 = vadd.f32 %v2039, %v2230
      %v2318 = vadd.f32 %v2040, %v2233
      %v2319 = vadd.f32 %v2041, %v2236
      %v2320 = vadd.f32 %v2042, %v2239
      %v2321 = vadd.f32 %v2043, %v2242
      %v2322 = vadd.f32 %v2044, %v2245
      %v2323 = vadd.f32 %v2045, %v2248
      %v2324 = vadd.f32 %v2046, %v2251
      %v2325 = vadd.f32 %v2047, %v2254
      %v2326 = vadd.f32 %v2048, %v2257
      %v2327 = vadd.f32 %v2049, %v2260
      %v2328 = vadd.f32 %v2050, %v2263
      %v2329 = vadd.f32 %v2051, %v2266
      %v2330 = vadd.f32 %v2052, %v2269
      %v2331 = vadd.f32 %v2053, %v2272
      %v2332 = vadd.f32 %v2054, %v2275
      %v2333 = vadd.f32 %v2055, %v2278
      %v2334 = vadd.f32 %v2056, %v2281
      %v2335 = vadd.f32 %v2057, %v2284
      %v2336 = vadd.f32 %v2058, %v2287
      %v2337 = vadd.f32 %v2059, %v2290
      %v2338 = vadd.f32 %v2060, %v2293
      %v2339 = vadd.f32 %v2061, %v2296
      %v2340 = vadd.f32 %v2062, %v2299
      %v2341 = vadd.f32 %v2063, %v2302
      %v2342 = vadd.f32 %v2064, %v2305
      %v2343 = vadd.f32 %v2065, %v2308
      %v2344 = vadd.f32 %v2066, %v2311
      %v2345 = vld [vmem:[%s1788 + $0x2] sm:$0xff]
      %v2346 = vld [vmem:[%s1788 + $0xa] sm:$0xff]
      %v2347 = vld [vmem:[%s1788 + $0x1a] sm:$0xff]
      %v2348 = vld [vmem:[%s1788 + $0x22] sm:$0xff]
      %v2349 = vld [vmem:[%s1788 + $0x32] sm:$0xff]
      %v2350 = vld [vmem:[%s1788 + $0x3a] sm:$0xff]
      %v2351 = vld [vmem:[%s1788 + $0x4a] sm:$0xff]
      %v2352 = vld [vmem:[%s1788 + $0x52] sm:$0xff]
      %v2353 = vld [vmem:[%s1788 + $0x62] sm:$0xff]
      %v2354 = vld [vmem:[%s1788 + $0x6a] sm:$0xff]
      %v2355 = vld [vmem:[%s1788 + $0x7a] sm:$0xff]
      %v2356 = vld [vmem:[%s1788 + $0x82] sm:$0xff]
      %v2357 = vld [vmem:[%s1788 + $0x92] sm:$0xff]
      %v2358 = vld [vmem:[%s1788 + $0x9a] sm:$0xff]
      %v2359 = vld [vmem:[%s1788 + $0xaa] sm:$0xff]
      %v2360 = vld [vmem:[%s1788 + $0xb2] sm:$0xff]
      %v2361 = vld [vmem:[%s1788 + $0xc2] sm:$0xff]
      %v2362 = vld [vmem:[%s1788 + $0xca] sm:$0xff]
      %v2363 = vld [vmem:[%s1788 + $0xda] sm:$0xff]
      %v2364 = vld [vmem:[%s1788 + $0xe2] sm:$0xff]
      %v2365 = vld [vmem:[%s1788 + $0xf2] sm:$0xff]
      %v2366 = vld [vmem:[%s1788 + $0xfa] sm:$0xff]
      %v2367 = vld [vmem:[%s1788 + $0x10a] sm:$0xff]
      %v2368 = vld [vmem:[%s1788 + $0x112] sm:$0xff]
      %v2369 = vld [vmem:[%s1788 + $0x122] sm:$0xff]
      %v2370 = vld [vmem:[%s1788 + $0x12a] sm:$0xff]
      %v2371 = vld [vmem:[%s1788 + $0x13a] sm:$0xff]
      %v2372 = vld [vmem:[%s1788 + $0x142] sm:$0xff]
      %v2373 = vld [vmem:[%s1788 + $0x152] sm:$0xff]
      %v2374 = vld [vmem:[%s1788 + $0x15a] sm:$0xff]
      %v2375 = vld [vmem:[%s1788 + $0x16a] sm:$0xff]
      %v2376 = vld [vmem:[%s1788 + $0x172] sm:$0xff]
      %s2377 = scalar_lea.vmem %s1, 32
      %v2378 = vld [vmem:[%s2377] sm:$0xf]
      %v2380 = vsel %vm249, %v2345, 0
      %v2383 = vsel %vm249, %v2346, 0
      %v2386 = vsel %vm249, %v2347, 0
      %v2389 = vsel %vm249, %v2348, 0
      %v2392 = vsel %vm249, %v2349, 0
      %v2395 = vsel %vm249, %v2350, 0
      %v2398 = vsel %vm249, %v2351, 0
      %v2401 = vsel %vm249, %v2352, 0
      %v2404 = vsel %vm249, %v2353, 0
      %v2407 = vsel %vm249, %v2354, 0
      %v2410 = vsel %vm249, %v2355, 0
      %v2413 = vsel %vm249, %v2356, 0
      %v2416 = vsel %vm249, %v2357, 0
      %v2419 = vsel %vm249, %v2358, 0
      %v2422 = vsel %vm249, %v2359, 0
      %v2425 = vsel %vm249, %v2360, 0
      %v2428 = vsel %vm249, %v2361, 0
      %v2431 = vsel %vm249, %v2362, 0
      %v2434 = vsel %vm249, %v2363, 0
      %v2437 = vsel %vm249, %v2364, 0
      %v2440 = vsel %vm249, %v2365, 0
      %v2443 = vsel %vm249, %v2366, 0
      %v2446 = vsel %vm249, %v2367, 0
      %v2449 = vsel %vm249, %v2368, 0
      %v2452 = vsel %vm249, %v2369, 0
      %v2455 = vsel %vm249, %v2370, 0
      %v2458 = vsel %vm249, %v2371, 0
      %v2461 = vsel %vm249, %v2372, 0
      %v2464 = vsel %vm249, %v2373, 0
      %v2467 = vsel %vm249, %v2374, 0
      %v2470 = vsel %vm249, %v2375, 0
      %v2473 = vsel %vm249, %v2376, 0
      %v2476 = vsel %vm346, %v2378, 0
      %2478 = vmatpush.msra.mxu0 0.0
      %2479 = vmatpush.msra.mxu0 0.0
      %2480 = vmatpush.msra.mxu0 0.0
      %2481 = vmatpush.msra.mxu0 0.0
      %2482 = vmatpush.msra.mxu0 0.0
      %2483 = vmatpush.msra.mxu0 0.0
      %2484 = vmatpush.msra.mxu0 0.0
      %2485 = vmatpush.msra.mxu0 0.0
      %2486 = vmatpush.msra.mxu0 0.0
      %2487 = vmatpush.msra.mxu0 0.0
      %2488 = vmatpush.msra.mxu0 0.0
      %2489 = vmatpush.msra.mxu0 0.0
      %2490 = vmatpush.msra.mxu0 0.0
      %2491 = vmatpush.msra.mxu0 0.0
      %2492 = vmatpush.msra.mxu0 0.0
      %2493 = vmatpush.msra.mxu0 %v2476
      %2494 = vmatmul.f32.gmra.mxu0 %v2380
      %v2495 = vpop.f32.mrf.mxu0
      %v2496 = vadd.f32 0.0, %v2495
      %2497 = vmatmul.f32.gmra.mxu0 %v2383
      %v2498 = vpop.f32.mrf.mxu0
      %v2499 = vadd.f32 0.0, %v2498
      %2500 = vmatmul.f32.gmra.mxu0 %v2386
      %v2501 = vpop.f32.mrf.mxu0
      %v2502 = vadd.f32 0.0, %v2501
      %2503 = vmatmul.f32.gmra.mxu0 %v2389
      %v2504 = vpop.f32.mrf.mxu0
      %v2505 = vadd.f32 0.0, %v2504
      %2506 = vmatmul.f32.gmra.mxu0 %v2392
      %v2507 = vpop.f32.mrf.mxu0
      %v2508 = vadd.f32 0.0, %v2507
      %2509 = vmatmul.f32.gmra.mxu0 %v2395
      %v2510 = vpop.f32.mrf.mxu0
      %v2511 = vadd.f32 0.0, %v2510
      %2512 = vmatmul.f32.gmra.mxu0 %v2398
      %v2513 = vpop.f32.mrf.mxu0
      %v2514 = vadd.f32 0.0, %v2513
      %2515 = vmatmul.f32.gmra.mxu0 %v2401
      %v2516 = vpop.f32.mrf.mxu0
      %v2517 = vadd.f32 0.0, %v2516
      %2518 = vmatmul.f32.gmra.mxu0 %v2404
      %v2519 = vpop.f32.mrf.mxu0
      %v2520 = vadd.f32 0.0, %v2519
      %2521 = vmatmul.f32.gmra.mxu0 %v2407
      %v2522 = vpop.f32.mrf.mxu0
      %v2523 = vadd.f32 0.0, %v2522
      %2524 = vmatmul.f32.gmra.mxu0 %v2410
      %v2525 = vpop.f32.mrf.mxu0
      %v2526 = vadd.f32 0.0, %v2525
      %2527 = vmatmul.f32.gmra.mxu0 %v2413
      %v2528 = vpop.f32.mrf.mxu0
      %v2529 = vadd.f32 0.0, %v2528
      %2530 = vmatmul.f32.gmra.mxu0 %v2416
      %v2531 = vpop.f32.mrf.mxu0
      %v2532 = vadd.f32 0.0, %v2531
      %2533 = vmatmul.f32.gmra.mxu0 %v2419
      %v2534 = vpop.f32.mrf.mxu0
      %v2535 = vadd.f32 0.0, %v2534
      %2536 = vmatmul.f32.gmra.mxu0 %v2422
      %v2537 = vpop.f32.mrf.mxu0
      %v2538 = vadd.f32 0.0, %v2537
      %2539 = vmatmul.f32.gmra.mxu0 %v2425
      %v2540 = vpop.f32.mrf.mxu0
      %v2541 = vadd.f32 0.0, %v2540
      %2542 = vmatmul.f32.gmra.mxu0 %v2428
      %v2543 = vpop.f32.mrf.mxu0
      %v2544 = vadd.f32 0.0, %v2543
      %2545 = vmatmul.f32.gmra.mxu0 %v2431
      %v2546 = vpop.f32.mrf.mxu0
      %v2547 = vadd.f32 0.0, %v2546
      %2548 = vmatmul.f32.gmra.mxu0 %v2434
      %v2549 = vpop.f32.mrf.mxu0
      %v2550 = vadd.f32 0.0, %v2549
      %2551 = vmatmul.f32.gmra.mxu0 %v2437
      %v2552 = vpop.f32.mrf.mxu0
      %v2553 = vadd.f32 0.0, %v2552
      %2554 = vmatmul.f32.gmra.mxu0 %v2440
      %v2555 = vpop.f32.mrf.mxu0
      %v2556 = vadd.f32 0.0, %v2555
      %2557 = vmatmul.f32.gmra.mxu0 %v2443
      %v2558 = vpop.f32.mrf.mxu0
      %v2559 = vadd.f32 0.0, %v2558
      %2560 = vmatmul.f32.gmra.mxu0 %v2446
      %v2561 = vpop.f32.mrf.mxu0
      %v2562 = vadd.f32 0.0, %v2561
      %2563 = vmatmul.f32.gmra.mxu0 %v2449
      %v2564 = vpop.f32.mrf.mxu0
      %v2565 = vadd.f32 0.0, %v2564
      %2566 = vmatmul.f32.gmra.mxu0 %v2452
      %v2567 = vpop.f32.mrf.mxu0
      %v2568 = vadd.f32 0.0, %v2567
      %2569 = vmatmul.f32.gmra.mxu0 %v2455
      %v2570 = vpop.f32.mrf.mxu0
      %v2571 = vadd.f32 0.0, %v2570
      %2572 = vmatmul.f32.gmra.mxu0 %v2458
      %v2573 = vpop.f32.mrf.mxu0
      %v2574 = vadd.f32 0.0, %v2573
      %2575 = vmatmul.f32.gmra.mxu0 %v2461
      %v2576 = vpop.f32.mrf.mxu0
      %v2577 = vadd.f32 0.0, %v2576
      %2578 = vmatmul.f32.gmra.mxu0 %v2464
      %v2579 = vpop.f32.mrf.mxu0
      %v2580 = vadd.f32 0.0, %v2579
      %2581 = vmatmul.f32.gmra.mxu0 %v2467
      %v2582 = vpop.f32.mrf.mxu0
      %v2583 = vadd.f32 0.0, %v2582
      %2584 = vmatmul.f32.gmra.mxu0 %v2470
      %v2585 = vpop.f32.mrf.mxu0
      %v2586 = vadd.f32 0.0, %v2585
      %2587 = vmatmul.f32.gmra.mxu0 %v2473
      %v2588 = vpop.f32.mrf.mxu0
      %v2589 = vadd.f32 0.0, %v2588
      %2590 = vdwg.mxu0
      %v2591 = vadd.f32 %v2313, %v2496
      %v2592 = vadd.f32 %v2314, %v2499
      %v2593 = vadd.f32 %v2315, %v2502
      %v2594 = vadd.f32 %v2316, %v2505
      %v2595 = vadd.f32 %v2317, %v2508
      %v2596 = vadd.f32 %v2318, %v2511
      %v2597 = vadd.f32 %v2319, %v2514
      %v2598 = vadd.f32 %v2320, %v2517
      %v2599 = vadd.f32 %v2321, %v2520
      %v2600 = vadd.f32 %v2322, %v2523
      %v2601 = vadd.f32 %v2323, %v2526
      %v2602 = vadd.f32 %v2324, %v2529
      %v2603 = vadd.f32 %v2325, %v2532
      %v2604 = vadd.f32 %v2326, %v2535
      %v2605 = vadd.f32 %v2327, %v2538
      %v2606 = vadd.f32 %v2328, %v2541
      %v2607 = vadd.f32 %v2329, %v2544
      %v2608 = vadd.f32 %v2330, %v2547
      %v2609 = vadd.f32 %v2331, %v2550
      %v2610 = vadd.f32 %v2332, %v2553
      %v2611 = vadd.f32 %v2333, %v2556
      %v2612 = vadd.f32 %v2334, %v2559
      %v2613 = vadd.f32 %v2335, %v2562
      %v2614 = vadd.f32 %v2336, %v2565
      %v2615 = vadd.f32 %v2337, %v2568
      %v2616 = vadd.f32 %v2338, %v2571
      %v2617 = vadd.f32 %v2339, %v2574
      %v2618 = vadd.f32 %v2340, %v2577
      %v2619 = vadd.f32 %v2341, %v2580
      %v2620 = vadd.f32 %v2342, %v2583
      %v2621 = vadd.f32 %v2343, %v2586
      %v2622 = vadd.f32 %v2344, %v2589
      %2623 = vst [vmem:[%s177] sm:$0xff] %v2591
      %2624 = vst [vmem:[%s177 + $0x8] sm:$0xff] %v2592
      %2625 = vst [vmem:[%s177 + $0x10] sm:$0xff] %v2593
      %2626 = vst [vmem:[%s177 + $0x18] sm:$0xff] %v2594
      %2627 = vst [vmem:[%s177 + $0x20] sm:$0xff] %v2595
      %2628 = vst [vmem:[%s177 + $0x28] sm:$0xff] %v2596
      %2629 = vst [vmem:[%s177 + $0x30] sm:$0xff] %v2597
      %2630 = vst [vmem:[%s177 + $0x38] sm:$0xff] %v2598
      %2631 = vst [vmem:[%s177 + $0x40] sm:$0xff] %v2599
      %2632 = vst [vmem:[%s177 + $0x48] sm:$0xff] %v2600
      %2633 = vst [vmem:[%s177 + $0x50] sm:$0xff] %v2601
      %2634 = vst [vmem:[%s177 + $0x58] sm:$0xff] %v2602
      %2635 = vst [vmem:[%s177 + $0x60] sm:$0xff] %v2603
      %2636 = vst [vmem:[%s177 + $0x68] sm:$0xff] %v2604
      %2637 = vst [vmem:[%s177 + $0x70] sm:$0xff] %v2605
      %2638 = vst [vmem:[%s177 + $0x78] sm:$0xff] %v2606
      %2639 = vst [vmem:[%s177 + $0x80] sm:$0xff] %v2607
      %2640 = vst [vmem:[%s177 + $0x88] sm:$0xff] %v2608
      %2641 = vst [vmem:[%s177 + $0x90] sm:$0xff] %v2609
      %2642 = vst [vmem:[%s177 + $0x98] sm:$0xff] %v2610
      %2643 = vst [vmem:[%s177 + $0xa0] sm:$0xff] %v2611
      %2644 = vst [vmem:[%s177 + $0xa8] sm:$0xff] %v2612
      %2645 = vst [vmem:[%s177 + $0xb0] sm:$0xff] %v2613
      %2646 = vst [vmem:[%s177 + $0xb8] sm:$0xff] %v2614
      %2647 = vst [vmem:[%s177 + $0xc0] sm:$0xff] %v2615
      %2648 = vst [vmem:[%s177 + $0xc8] sm:$0xff] %v2616
      %2649 = vst [vmem:[%s177 + $0xd0] sm:$0xff] %v2617
      %2650 = vst [vmem:[%s177 + $0xd8] sm:$0xff] %v2618
      %2651 = vst [vmem:[%s177 + $0xe0] sm:$0xff] %v2619
      %2652 = vst [vmem:[%s177 + $0xe8] sm:$0xff] %v2620
      %2653 = vst [vmem:[%s177 + $0xf0] sm:$0xff] %v2621
      %2654 = vst [vmem:[%s177 + $0xf8] sm:$0xff] %v2622
      %v2655 = vadd.f32 %v2591, %v2592
      %v2656 = vadd.f32 %v2655, %v2593
      %v2657 = vadd.f32 %v2656, %v2594
      %v2658 = vadd.f32 %v2657, %v2595
      %v2659 = vadd.f32 %v2658, %v2596
      %v2660 = vadd.f32 %v2659, %v2597
      %v2661 = vadd.f32 %v2660, %v2598
      %v2662 = vadd.f32 %v2661, %v2599
      %v2663 = vadd.f32 %v2662, %v2600
      %v2664 = vadd.f32 %v2663, %v2601
      %v2665 = vadd.f32 %v2664, %v2602
      %v2666 = vadd.f32 %v2665, %v2603
      %v2667 = vadd.f32 %v2666, %v2604
      %v2668 = vadd.f32 %v2667, %v2605
      %v2669 = vadd.f32 %v2668, %v2606
      %v2670 = vadd.f32 %v2669, %v2607
      %v2671 = vadd.f32 %v2670, %v2608
      %v2672 = vadd.f32 %v2671, %v2609
      %v2673 = vadd.f32 %v2672, %v2610
      %v2674 = vadd.f32 %v2673, %v2611
      %v2675 = vadd.f32 %v2674, %v2612
      %v2676 = vadd.f32 %v2675, %v2613
      %v2677 = vadd.f32 %v2676, %v2614
      %v2678 = vadd.f32 %v2677, %v2615
      %v2679 = vadd.f32 %v2678, %v2616
      %v2680 = vadd.f32 %v2679, %v2617
      %v2681 = vadd.f32 %v2680, %v2618
      %v2682 = vadd.f32 %v2681, %v2619
      %v2683 = vadd.f32 %v2682, %v2620
      %v2684 = vadd.f32 %v2683, %v2621
      %v2685 = vadd.f32 %v2684, %v2622
      %v2686 = vrot.slane %v2685, 4
      %v2687 = vadd.f32 %v2685, %v2686
      %v2688 = vrot.slane %v2687, 2
      %v2689 = vadd.f32 %v2687, %v2688
      %v2690 = vrot.slane %v2689, 1
      %v2691 = vadd.f32 %v2689, %v2690
      %2692 = vst [vmem:[%s181] sm:$0x1] %v2691
      %v2693 = vmul.f32 %v2591, %v2591
      %v2694 = vmul.f32 %v2592, %v2592
      %v2695 = vmul.f32 %v2593, %v2593
      %v2696 = vmul.f32 %v2594, %v2594
      %v2697 = vmul.f32 %v2595, %v2595
      %v2698 = vmul.f32 %v2596, %v2596
      %v2699 = vmul.f32 %v2597, %v2597
      %v2700 = vmul.f32 %v2598, %v2598
      %v2701 = vmul.f32 %v2599, %v2599
      %v2702 = vmul.f32 %v2600, %v2600
      %v2703 = vmul.f32 %v2601, %v2601
      %v2704 = vmul.f32 %v2602, %v2602
      %v2705 = vmul.f32 %v2603, %v2603
      %v2706 = vmul.f32 %v2604, %v2604
      %v2707 = vmul.f32 %v2605, %v2605
      %v2708 = vmul.f32 %v2606, %v2606
      %v2709 = vmul.f32 %v2607, %v2607
      %v2710 = vmul.f32 %v2608, %v2608
      %v2711 = vmul.f32 %v2609, %v2609
      %v2712 = vmul.f32 %v2610, %v2610
      %v2713 = vmul.f32 %v2611, %v2611
      %v2714 = vmul.f32 %v2612, %v2612
      %v2715 = vmul.f32 %v2613, %v2613
      %v2716 = vmul.f32 %v2614, %v2614
      %v2717 = vmul.f32 %v2615, %v2615
      %v2718 = vmul.f32 %v2616, %v2616
      %v2719 = vmul.f32 %v2617, %v2617
      %v2720 = vmul.f32 %v2618, %v2618
      %v2721 = vmul.f32 %v2619, %v2619
      %v2722 = vmul.f32 %v2620, %v2620
      %v2723 = vmul.f32 %v2621, %v2621
      %v2724 = vmul.f32 %v2622, %v2622
      %v2725 = vadd.f32 %v2693, %v2694
      %v2726 = vadd.f32 %v2725, %v2695
      %v2727 = vadd.f32 %v2726, %v2696
      %v2728 = vadd.f32 %v2727, %v2697
      %v2729 = vadd.f32 %v2728, %v2698
      %v2730 = vadd.f32 %v2729, %v2699
      %v2731 = vadd.f32 %v2730, %v2700
      %v2732 = vadd.f32 %v2731, %v2701
      %v2733 = vadd.f32 %v2732, %v2702
      %v2734 = vadd.f32 %v2733, %v2703
      %v2735 = vadd.f32 %v2734, %v2704
      %v2736 = vadd.f32 %v2735, %v2705
      %v2737 = vadd.f32 %v2736, %v2706
      %v2738 = vadd.f32 %v2737, %v2707
      %v2739 = vadd.f32 %v2738, %v2708
      %v2740 = vadd.f32 %v2739, %v2709
      %v2741 = vadd.f32 %v2740, %v2710
      %v2742 = vadd.f32 %v2741, %v2711
      %v2743 = vadd.f32 %v2742, %v2712
      %v2744 = vadd.f32 %v2743, %v2713
      %v2745 = vadd.f32 %v2744, %v2714
      %v2746 = vadd.f32 %v2745, %v2715
      %v2747 = vadd.f32 %v2746, %v2716
      %v2748 = vadd.f32 %v2747, %v2717
      %v2749 = vadd.f32 %v2748, %v2718
      %v2750 = vadd.f32 %v2749, %v2719
      %v2751 = vadd.f32 %v2750, %v2720
      %v2752 = vadd.f32 %v2751, %v2721
      %v2753 = vadd.f32 %v2752, %v2722
      %v2754 = vadd.f32 %v2753, %v2723
      %v2755 = vadd.f32 %v2754, %v2724
      %v2756 = vrot.slane %v2755, 4
      %v2757 = vadd.f32 %v2755, %v2756
      %v2758 = vrot.slane %v2757, 2
      %v2759 = vadd.f32 %v2757, %v2758
      %v2760 = vrot.slane %v2759, 1
      %v2761 = vadd.f32 %v2759, %v2760
      %2762 = vst [vmem:[%s181 + $0x1] sm:$0x1] %v2761
      %p2763 = scmp.lt.s32.totalorder %s15, 1
      %s2764 = scalar_select %p2763, %s15, 1
      %s2765 = smul.addr %s2764, 32
      %s2766 = smul.addr %s2765, 8
      %s2767 = scalar_lea.vmem %s2, %s2766
      %p2768 = scmp.lt.s32.totalorder %s15, 1
      %s2769 = scalar_select %p2768, %s15, 1
      %s2770 = smul.addr %s2769, 2
      %s2771 = scalar_lea.vmem %s3, %s2770
      // Predicated region
      $region29: #{conv_bn_relu.2} parent=27 // pred_check
        %p2772 = pneg %p80
      $region30: #{conv_bn_relu.2} parent=27 // pred_check_branch
        %2774 = sbr.rel (%p2772) target = $region32
      $region31: #{conv_bn_relu.2} parent=27 // pred_region
        _
      $region32: #{conv_bn_relu.2} parent=27 // pred_fallthru
        _
      // Predicated region
      $region33: #{conv_bn_relu.2} parent=27 // pred_check
        %p2775 = pneg %p106
      $region34: #{conv_bn_relu.2} parent=27 // pred_check_branch
        %2777 = sbr.rel (%p2775) target = $region36
      $region35: #{conv_bn_relu.2} parent=27 // pred_region
        _
      $region36: #{conv_bn_relu.2} parent=27 // pred_fallthru
        _
    $region28: #{conv_bn_relu.2} parent=5 // pred_fallthru
      _
    %p2778 = scmp.le.s32.totalorder 2, %s10
    // Predicated region
    $region37: #{conv_bn_relu.2} parent=5 // pred_check
      %p2779 = pneg %p2778
    $region38: #{conv_bn_relu.2} parent=5 // pred_check_branch
      %2781 = sbr.rel (%p2779) target = $region40
    $region39: #{conv_bn_relu.2} parent=5 // pred_region
      %s2782 = ssub.s32 %s10, 2
      // Predicated region
      $region41: #{conv_bn_relu.2} parent=39 // pred_check
        %p2783 = pneg %p86
      $region42: #{conv_bn_relu.2} parent=39 // pred_check_branch
        %2785 = sbr.rel (%p2783) target = $region44
      $region43: #{conv_bn_relu.2} parent=39 // pred_region
        %p2786 = scmp.lt.s32.totalorder %s16, 1
        %s2787 = scalar_select %p2786, %s16, 1
        %s2788 = smul.addr %s2787, 32
        %s2789 = smul.addr %s2788, 8
        %s2790 = scalar_lea.vmem %s2, %s2789
      $region44: #{conv_bn_relu.2} parent=39 // pred_fallthru
        _
      // Predicated region
      $region45: #{conv_bn_relu.2} parent=39 // pred_check
        %p2791 = pneg %p112
      $region46: #{conv_bn_relu.2} parent=39 // pred_check_branch
        %2793 = sbr.rel (%p2791) target = $region48
      $region47: #{conv_bn_relu.2} parent=39 // pred_region
        %p2794 = scmp.lt.s32.totalorder %s16, 1
        %s2795 = scalar_select %p2794, %s16, 1
        %s2796 = smul.addr %s2795, 2
        %s2797 = scalar_lea.vmem %s3, %s2796
      $region48: #{conv_bn_relu.2} parent=39 // pred_fallthru
        _
    $region40: #{conv_bn_relu.2} parent=5 // pred_fallthru
      _
  $region6: #{conv_bn_relu.2} parent=0 // loop_footer
    %s14 = sadd.s32 1, %s10
  $region7: #{conv_bn_relu.2} parent=0 // loop_footer_branch
    %9 = sbr.rel target = $region3
  $region8: #{conv_bn_relu.2} parent=0 // loop_exit
    _

</llo_original>
